<compile_context>
chip_gen: v7x
topology: tpu7x:2x2x1
jax: 0.10.0
libtpu: 0.0.40
codegen_flags: <defaults>
</compile_context>

<pallas_src>
import math

import jax
import jax.numpy as jnp
from jax import lax
from jax.experimental import pallas as pl
from jax.experimental.pallas import tpu as pltpu

LN_EPS = 1e-5                      # nn.LayerNorm default eps
_SQRT2_INV = 1.0 / math.sqrt(2.0)  # exact (erf) GELU constant, nn.GELU default


# --------------------------------- generation-aware VMEM budget ---------------------------------
def _vmem_budget_bytes():
    cap = None
    try:
        cap = int(getattr(pltpu.get_tpu_info(), "vmem_capacity_bytes", 0)) or None
    except Exception:
        cap = None
    if cap is None:
        cap = 64 * 1024 * 1024          # conservative fallback: smallest physical VMEM (v7x)
    return (cap * 3) // 4               # ~25% headroom for Mosaic-internal scratch


def _mxu_dtype(dtype):
    # v5e/v6e/v7x MXUs are bf16-native; f32 operands lower to slow multi-pass matmuls.
    return jnp.bfloat16 if dtype == jnp.float32 else dtype


# --------------------- Kernel A: conv3x3 (+bias) + LayerNorm -> channels-last tokens ---------------------
def _conv3x3_ln_kernel(xm_ref, xh_ref, w_ref, b_ref, g_ref, bt_ref, o_ref, xbuf_ref):
    # xm_ref: (1, TH, W+2, Cin)   main rows of the padded NHWC image for this (batch, row-tile)
    # xh_ref: (1, 2,  W+2, Cin)   2-row bottom halo (next rows of the same padded image)
    # w_ref : (9, Cin, Cout)      conv weights, tap-major (kh*3 + kw)
    # b_ref, g_ref, bt_ref : (1, Cout)  conv bias, LN gamma, LN beta (f32)
    # o_ref : (1, TH*W, Cout)     norm1(conv(x)).flatten(2).transpose(1, 2) rows for this tile
    TH, Wp, Cin = xm_ref.shape[1], xm_ref.shape[2], xm_ref.shape[3]
    W = Wp - 2
    Cout = w_ref.shape[2]

    # Stitch main + halo into one (TH+2, W+2, Cin) VMEM slab (one cheap leading-dim copy; replaces
    # the old 9-way im2col concat that materialized ~9x the tile).
    xbuf_ref[pl.ds(0, TH)] = xm_ref[0]
    xbuf_ref[pl.ds(TH, 2)] = xh_ref[0]

    # 9 accumulating K=Cin MXU dots (f32 accumulator); slices are transient, footprint stays ~1 tile.
    acc = None
    for kh in range(3):                                   # static unroll
        for kw in range(3):
            lhs = xbuf_ref[kh:kh + TH, kw:kw + W, :].reshape(TH * W, Cin)
            part = jnp.dot(lhs, w_ref[kh * 3 + kw], preferred_element_type=jnp.float32)
            acc = part if acc is None else acc + part
    acc = acc + b_ref[...].astype(jnp.float32)            # (TH*W, Cout), f32

    # LayerNorm over channels (f32 math, biased variance like PyTorch).
    mu = jnp.mean(acc, axis=-1, keepdims=True)
    var = jnp.mean(jnp.square(acc - mu), axis=-1, keepdims=True)
    y = (acc - mu) * lax.rsqrt(var + LN_EPS)
    y = y * g_ref[...].astype(jnp.float32) + bt_ref[...].astype(jnp.float32)
    o_ref[0] = y.astype(o_ref.dtype)


def _pick_row_tile(H, W, Cin, Cout, in_itemsize, budget):
    """Largest multiple-of-8 row tile whose double-buffered working set fits the VMEM budget."""
    Wp = W + 2
    h_cap = max(8, ((H + 7) // 8) * 8)
    best, th = 8, 8
    while th <= h_cap:
        main_in = th * Wp * Cin * in_itemsize            # auto-pipelined (double-buffered)
        halo_in = 2 * Wp * Cin * in_itemsize
        out_t = th * W * Cout * 4                        # output tile (<= f32), double-buffered
        stitched = (th + 2) * Wp * Cin * in_itemsize     # VMEM scratch slab
        weights = 9 * Cin * Cout * in_itemsize           # resident, double-buffered by Pallas
        transient = 2 * th * W * Cin * in_itemsize + th * W * Cout * 4
        total = 2 * (main_in + halo_in + out_t) + 2 * weights + stitched + transient
        if total > budget:
            break
        best = th
        th += 8
    return best


def conv3x3_ln_tokens(x_nchw, w_oihw, bias, gamma, beta, *, row_tile=None):
    """Fused norm1(conv2d_3x3_same(x).flatten(2).transpose(1, 2)) -> (B, H*W, Cout)."""
    B, Cin, H, W = x_nchw.shape
    Cout = w_oihw.shape[0]
    mxu_dtype = _mxu_dtype(x_nchw.dtype)
    budget = _vmem_budget_bytes()

    if row_tile is None:
        TH = _pick_row_tile(H, W, Cin, Cout, jnp.dtype(mxu_dtype).itemsize, budget)
    else:
        TH = max(8, ((int(row_tile) + 7) // 8) * 8)
    TH = min(TH, max(8, ((H + 7) // 8) * 8))
    Hpad = ((H + TH - 1) // TH) * TH
    R = Hpad // TH
    Wp = W + 2

    # One layout change at block entry: NCHW -> padded NHWC in the MXU operand dtype (channels on
    # the lane axis).  The +1 halo pad rides along with the unavoidable transpose pass.
    # TODO(synk): replace the wrapper-side pad with a clamped manual-DMA halo fetch to drop this
    # extra HBM materialization entirely.
    x_nhwc = jnp.transpose(x_nchw, (0, 2, 3, 1))
    xp = jnp.pad(x_nhwc, ((0, 0), (1, 1 + (Hpad - H)), (1, 1), (0, 0))).astype(mxu_dtype)

    # OIHW -> (kh, kw, cin, cout) -> (9, Cin, Cout), tap-major to match the in-kernel loop order.
    w9 = jnp.transpose(w_oihw, (2, 3, 1, 0)).reshape(9, Cin, Cout).astype(mxu_dtype)

    out = pl.pallas_call(
        _conv3x3_ln_kernel,
        out_shape=jax.ShapeDtypeStruct((B, Hpad * W, Cout), x_nchw.dtype),
        grid=(B, R),
        in_specs=[
            pl.BlockSpec((1, TH, Wp, Cin), lambda b, r: (b, r, 0, 0)),
            # 2-row bottom halo: element offset (r+1)*TH == block index (r+1)*(TH//2) (TH is even).
            pl.BlockSpec((1, 2, Wp, Cin), lambda b, r: (b, (r + 1) * (TH // 2), 0, 0)),
            pl.BlockSpec((9, Cin, Cout), lambda b, r: (0, 0, 0)),
            pl.BlockSpec((1, Cout), lambda b, r: (0, 0)),
            pl.BlockSpec((1, Cout), lambda b, r: (0, 0)),
            pl.BlockSpec((1, Cout), lambda b, r: (0, 0)),
        ],
        out_specs=pl.BlockSpec((1, TH * W, Cout), lambda b, r: (b, r, 0)),
        scratch_shapes=[pltpu.VMEM((TH + 2, Wp, Cin), mxu_dtype)],
        compiler_params=pltpu.CompilerParams(
            dimension_semantics=("parallel", "parallel"),
            vmem_limit_bytes=budget),
    )(xp, xp, w9,
      bias.reshape(1, Cout).astype(jnp.float32),
      gamma.reshape(1, Cout).astype(jnp.float32),
      beta.reshape(1, Cout).astype(jnp.float32))
    if Hpad != H:
        out = out[:, :H * W, :]
    return out


# --------------------- Kernel B: MLP (Linear -> GELU -> Linear) + LayerNorm, fused ---------------------
def _mlp_ln_kernel(x_ref, w1_ref, b1_ref, w2_ref, b2_ref, g_ref, bt_ref, o_ref):
    # x_ref: (T, D) token tile (MXU dtype); w1: (D, Hd); w2: (Hd, D); row vectors as (1, .) in f32.
    x = x_ref[...]
    h = jnp.dot(x, w1_ref[...], preferred_element_type=jnp.float32)
    h = h + b1_ref[...].astype(jnp.float32)
    # TODO(synk): on v5e consider tanh-approx GELU if the VPU/EUP transcendental slot binds.
    h = 0.5 * h * (1.0 + lax.erf(h * _SQRT2_INV))          # exact GELU in f32
    y = jnp.dot(h.astype(w2_ref.dtype), w2_ref[...], preferred_element_type=jnp.float32)
    y = y + b2_ref[...].astype(jnp.float32)
    mu = jnp.mean(y, axis=-1, keepdims=True)
    var = jnp.mean(jnp.square(y - mu), axis=-1, keepdims=True)
    z = (y - mu) * lax.rsqrt(var + LN_EPS)
    z = z * g_ref[...].astype(jnp.float32) + bt_ref[...].astype(jnp.float32)
    o_ref[...] = z.astype(o_ref.dtype)


def mlp_ln_lastdim(x, w1, b1, w2, b2, gamma, beta, *, max_tile=512):
    """Fused norm2(fc2(gelu(fc1(x)))) over the trailing dim, tiled over flattened tokens."""
    shape = x.shape
    D = shape[-1]
    Hd = w1.shape[1]
    mxu_dtype = _mxu_dtype(x.dtype)
    itemsize = jnp.dtype(mxu_dtype).itemsize
    budget = _vmem_budget_bytes()

    x2 = x.reshape(-1, D).astype(mxu_dtype)
    N = x2.shape[0]

    # Token tile: as large as max_tile / the VMEM budget allow (multiple of 8, padded tail) so the
    # MXU M-dim stays fed and per-grid-step overhead is amortized.
    # TODO(synk): for very large D/Hd, single-buffer the resident weights (pipeline_mode=
    # pl.Buffered(1)) or add a K grid axis with an f32 VMEM scratch accumulator.
    wbytes = 2 * 2 * (D * Hd + Hd * D) * itemsize          # both weights, double-buffered
    tile = max(8, (max_tile // 8) * 8)
    while tile > 8:
        per = 2 * tile * D * itemsize + 2 * tile * D * 4 + tile * Hd * 4 + tile * D * 4
        if wbytes + per <= budget:
            break
        tile -= 8
    if N < tile:
        tile = ((N + 7) // 8) * 8
    n_pad = (-N) % tile
    if n_pad:
        x2 = jnp.pad(x2, ((0, n_pad), (0, 0)))
    Np = N + n_pad

    out = pl.pallas_call(
        _mlp_ln_kernel,
        out_shape=jax.ShapeDtypeStruct((Np, D), x.dtype),
        grid=(Np // tile,),
        in_specs=[
            pl.BlockSpec((tile, D), lambda i: (i, 0)),
            pl.BlockSpec((D, Hd), lambda i: (0, 0)),
            pl.BlockSpec((1, Hd), lambda i: (0, 0)),
            pl.BlockSpec((Hd, D), lambda i: (0, 0)),
            pl.BlockSpec((1, D), lambda i: (0, 0)),
            pl.BlockSpec((1, D), lambda i: (0, 0)),
            pl.BlockSpec((1, D), lambda i: (0, 0)),
        ],
        out_specs=pl.BlockSpec((tile, D), lambda i: (i, 0)),
        compiler_params=pltpu.CompilerParams(
            dimension_semantics=("parallel",),
            vmem_limit_bytes=budget),
    )(x2, w1.astype(mxu_dtype), b1.reshape(1, Hd).astype(jnp.float32),
      w2.astype(mxu_dtype), b2.reshape(1, D).astype(jnp.float32),
      gamma.reshape(1, D).astype(jnp.float32), beta.reshape(1, D).astype(jnp.float32))
    if n_pad:
        out = out[:N]
    return out.reshape(shape)


# ------------------------------ BlockA.forward (exact PyTorch semantics) ------------------------------
def block_a_forward(x, p):
    B, C, H, W = x.shape
    # _x = self.norm1(self.conv(x).flatten(2).transpose(1, 2))        [fused kernel A]
    _x = conv3x3_ln_tokens(x, p["conv_w"], p["conv_b"], p["ln1_g"], p["ln1_b"])
    # x = x.reshape(B, H, W, -1).permute(0, 3, 1, 2); x = x + _x
    # TODO(synk): the raw reshape + right-aligned broadcast are PyTorch data reinterpretations that
    # are only shape-consistent for degenerate shapes, so the residual adds stay as jnp ops here
    # rather than being fused into the kernels (which would change those semantics).
    x = jnp.transpose(x.reshape(B, H, W, -1), (0, 3, 1, 2))
    x = x + _x
    # _x1 = self.norm2(self.ffn(x))                                   [fused kernel B]
    _x1 = mlp_ln_lastdim(x, p["fc1_w"], p["fc1_b"], p["fc2_w"], p["fc2_b"],
                         p["ln2_g"], p["ln2_b"])
    # _x1 = _x1.reshape(B, H, W, -1).permute(0, 3, 1, 2); x = x + _x1
    _x1 = jnp.transpose(_x1.reshape(B, H, W, -1), (0, 3, 1, 2))
    return x + _x1


# ------------------------------------- pure-JAX references -------------------------------------
def _ref_ln(x, g, b):
    mu = jnp.mean(x, axis=-1, keepdims=True)
    var = jnp.mean(jnp.square(x - mu), axis=-1, keepdims=True)
    return (x - mu) * lax.rsqrt(var + LN_EPS) * g + b


def _cast_like_mxu(a, mxu_dtype):
    return a if mxu_dtype is None else a.astype(mxu_dtype).astype(jnp.float32)


def _ref_conv_ln_tokens(x, w, b, g, bt, mxu_dtype=None):
    B, C, H, W = x.shape
    y = lax.conv_general_dilated(
        _cast_like_mxu(x, mxu_dtype), _cast_like_mxu(w, mxu_dtype),
        window_strides=(1, 1), padding="SAME",
        dimension_numbers=("NCHW", "OIHW", "NCHW"),
        precision=lax.Precision.HIGHEST) + b[None, :, None, None]
    y = jnp.transpose(y.reshape(B, w.shape[0], H * W), (0, 2, 1))
    return _ref_ln(y, g, bt)


def _ref_mlp_ln(x, w1, b1, w2, b2, g, bt, mxu_dtype=None):
    h = jnp.dot(_cast_like_mxu(x, mxu_dtype), _cast_like_mxu(w1, mxu_dtype),
                precision=lax.Precision.HIGHEST) + b1
    h = 0.5 * h * (1.0 + lax.erf(h * _SQRT2_INV))
    y = jnp.dot(_cast_like_mxu(h, mxu_dtype), _cast_like_mxu(w2, mxu_dtype),
                precision=lax.Precision.HIGHEST) + b2
    return _ref_ln(y, g, bt)


def _ref_forward(x, p):
    B, C, H, W = x.shape
    _x = _ref_conv_ln_tokens(x, p["conv_w"], p["conv_b"], p["ln1_g"], p["ln1_b"])
    x = jnp.transpose(x.reshape(B, H, W, -1), (0, 3, 1, 2))
    x = x + _x
    _x1 = _ref_mlp_ln(x, p["fc1_w"], p["fc1_b"], p["fc2_w"], p["fc2_b"],
                      p["ln2_g"], p["ln2_b"])
    _x1 = jnp.transpose(_x1.reshape(B, H, W, -1), (0, 3, 1, 2))
    return x + _x1


# --------------------------------------- parameter init ---------------------------------------
def init_params(key, in_channels, mlp_ratio=4.0):
    C = in_channels                 # inter_channels = in_channels in BlockA.__init__
    Hd = int(C * mlp_ratio)
    ks = jax.random.split(key, 10)
    n = lambda k, s, sc: sc * jax.random.normal(k, s, jnp.float32)
    return {
        "conv_w": n(ks[0], (C, C, 3, 3), 0.3),   # OIHW
        "conv_b": n(ks[1], (C,), 0.1),
        "ln1_g": 1.0 + n(ks[2], (C,), 0.1),
        "ln1_b": n(ks[3], (C,), 0.1),
        "fc1_w": n(ks[4], (C, Hd), 0.3),         # (in, hidden) right-multiply layout
        "fc1_b": n(ks[5], (Hd,), 0.1),
        "fc2_w": n(ks[6], (Hd, C), 0.3),
        "fc2_b": n(ks[7], (C,), 0.1),
        "ln2_g": 1.0 + n(ks[8], (C,), 0.1),
        "ln2_b": n(ks[9], (C,), 0.1),
    }


if __name__ == "__main__":
    key = jax.random.PRNGKey(0)
    k_e2e_x, k_e2e_p, k_v_x, k_v_p, k_v_t = jax.random.split(key, 5)

    # (1) End-to-end BlockA.  The original forward's broadcasting is only shape-consistent for the
    #     degenerate family in_channels == 1, W == 1 (B, H free); exercise exactly that family.
    B, C, H, W = 2, 1, 16, 1
    x = jax.random.normal(k_e2e_x, (B, C, H, W), jnp.float32)
    params = init_params(k_e2e_p, in_channels=C, mlp_ratio=4.0)

    out = jax.block_until_ready(block_a_forward(x, params))
    ref = jax.block_until_ready(_ref_forward(x, params))
    assert out.shape == ref.shape == (2, 2, 16, 1), (out.shape, ref.shape)
    err_e2e = float(jnp.max(jnp.abs(out - ref)))
    assert jnp.allclose(out, ref, atol=1e-4, rtol=1e-4), err_e2e

    # (2) Kernel-level validation at a realistic channel count (C = 128), exercising the row-tiled
    #     halo path (row_tile=8 -> 2 row tiles) and the MLP multi-tile + padded-tail path.  The
    #     reference applies the same bf16 operand casts so the comparison is apples-to-apples.
    Bv, Cv, Hv, Wv = 2, 128, 16, 16
    pv = init_params(k_v_p, in_channels=Cv, mlp_ratio=4.0)
    xv = jax.random.normal(k_v_x, (Bv, Cv, Hv, Wv), jnp.float32)

    tok = jax.block_until_ready(
        conv3x3_ln_tokens(xv, pv["conv_w"], pv["conv_b"], pv["ln1_g"], pv["ln1_b"], row_tile=8))
    tok_ref = _ref_conv_ln_tokens(xv, pv["conv_w"], pv["conv_b"], pv["ln1_g"], pv["ln1_b"],
                                  mxu_dtype=jnp.bfloat16)
    err_conv = float(jnp.max(jnp.abs(tok - tok_ref)))
    assert jnp.allclose(tok, tok_ref, atol=2e-2, rtol=2e-2), err_conv

    xt = jax.random.normal(k_v_t, (Bv * Hv * Wv, Cv), jnp.float32)
    mm = jax.block_until_ready(
        mlp_ln_lastdim(xt, pv["fc1_w"], pv["fc1_b"], pv["fc2_w"], pv["fc2_b"],
                       pv["ln2_g"], pv["ln2_b"], max_tile=192))
    mm_ref = _ref_mlp_ln(xt, pv["fc1_w"], pv["fc1_b"], pv["fc2_w"], pv["fc2_b"],
                         pv["ln2_g"], pv["ln2_b"], mxu_dtype=jnp.bfloat16)
    err_mlp = float(jnp.max(jnp.abs(mm - mm_ref)))
    assert jnp.allclose(mm, mm_ref, atol=2e-2, rtol=2e-2), err_mlp

    print("KERNEL_OK")
</pallas_src>

<mosaic_0001>
module attributes {stable_mosaic.version = 11 : i64} {
  func.func @_conv3x3_ln_kernel(%arg0: i32, %arg1: i32, %arg2: memref<1x16x3x1xbf16, #tpu.memory_space<vmem>>, %arg3: memref<1x2x3x1xbf16, #tpu.memory_space<vmem>>, %arg4: memref<9x1x1xbf16, #tpu.memory_space<vmem>>, %arg5: memref<1x1xf32, #tpu.memory_space<vmem>>, %arg6: memref<1x1xf32, #tpu.memory_space<vmem>>, %arg7: memref<1x1xf32, #tpu.memory_space<vmem>>, %arg8: memref<1x16x1xf32, #tpu.memory_space<vmem>>, %arg9: memref<18x3x1xbf16, #tpu.memory_space<vmem>>) attributes {dimension_semantics = [#tpu.dimension_semantics<parallel>, #tpu.dimension_semantics<parallel>], iteration_bounds = array<i64: 2, 1>, scalar_prefetch = 0 : i64, scratch_operands = 1 : i64, tpu.core_type = #tpu.core_type<tc>, window_params = [{transform_indices = @transform_0, window_bounds = array<i64: 1, 16, 3, 1>}, {transform_indices = @transform_1, window_bounds = array<i64: 1, 2, 3, 1>}, {pipeline_mode = #tpu.pipeline_mode<synchronous>, transform_indices = @transform_2, window_bounds = array<i64: 9, 1, 1>}, {pipeline_mode = #tpu.pipeline_mode<synchronous>, transform_indices = @transform_3, window_bounds = array<i64: 1, 1>}, {pipeline_mode = #tpu.pipeline_mode<synchronous>, transform_indices = @transform_4, window_bounds = array<i64: 1, 1>}, {pipeline_mode = #tpu.pipeline_mode<synchronous>, transform_indices = @transform_5, window_bounds = array<i64: 1, 1>}, {transform_indices = @transform_6, window_bounds = array<i64: 1, 16, 1>}]} {
    %c0 = arith.constant 0 : index
    %c0_0 = arith.constant 0 : index
    %c0_1 = arith.constant 0 : index
    %c0_2 = arith.constant 0 : index
    %0 = vector.load %arg2[%c0, %c0_0, %c0_1, %c0_2] : memref<1x16x3x1xbf16, #tpu.memory_space<vmem>>, vector<1x16x3x1xbf16>
    %1 = vector.shape_cast %0 : vector<1x16x3x1xbf16> to vector<16x3x1xbf16>
    %c0_3 = arith.constant 0 : index
    %c0_4 = arith.constant 0 : index
    %c0_5 = arith.constant 0 : index
    %2 = vector.load %arg9[%c0_3, %c0_4, %c0_5] : memref<18x3x1xbf16, #tpu.memory_space<vmem>>, vector<16x3x1xbf16>
    tpu.vector_store %arg9[%c0_3, %c0_4, %c0_5], %1 {strides = array<i32>} : memref<18x3x1xbf16, #tpu.memory_space<vmem>>, vector<16x3x1xbf16>,
    %c0_6 = arith.constant 0 : index
    %c0_7 = arith.constant 0 : index
    %c0_8 = arith.constant 0 : index
    %c0_9 = arith.constant 0 : index
    %3 = vector.load %arg3[%c0_6, %c0_7, %c0_8, %c0_9] : memref<1x2x3x1xbf16, #tpu.memory_space<vmem>>, vector<1x2x3x1xbf16>
    %4 = vector.shape_cast %3 : vector<1x2x3x1xbf16> to vector<2x3x1xbf16>
    %c16 = arith.constant 16 : index
    %c0_10 = arith.constant 0 : index
    %c0_11 = arith.constant 0 : index
    %5 = vector.load %arg9[%c16, %c0_10, %c0_11] : memref<18x3x1xbf16, #tpu.memory_space<vmem>>, vector<2x3x1xbf16>
    tpu.vector_store %arg9[%c16, %c0_10, %c0_11], %4 {strides = array<i32>} : memref<18x3x1xbf16, #tpu.memory_space<vmem>>, vector<2x3x1xbf16>,
    %c0_12 = arith.constant 0 : index
    %c0_13 = arith.constant 0 : index
    %c0_14 = arith.constant 0 : index
    %6 = vector.load %arg9[%c0_12, %c0_13, %c0_14] : memref<18x3x1xbf16, #tpu.memory_space<vmem>>, vector<16x1x1xbf16>
    %7 = vector.shape_cast %6 : vector<16x1x1xbf16> to vector<16x1xbf16>
    %c0_15 = arith.constant 0 : index
    %c0_16 = arith.constant 0 : index
    %c0_17 = arith.constant 0 : index
    %8 = vector.load %arg4[%c0_15, %c0_16, %c0_17] : memref<9x1x1xbf16, #tpu.memory_space<vmem>>, vector<1x1x1xbf16>
    %9 = vector.shape_cast %8 : vector<1x1x1xbf16> to vector<1x1xbf16>
    %cst = arith.constant dense<0.000000e+00> : vector<16x1xf32>
    %10 = tpu.matmul %7, %9, %cst {dimension_numbers = #tpu.dot_dimension_numbers<[1], [0], [0], [1], [0, 0, 1, 1], [], []>} : vector<16x1xbf16>, vector<1x1xbf16>, vector<16x1xf32> -> vector<16x1xf32>
    %c0_18 = arith.constant 0 : index
    %c1 = arith.constant 1 : index
    %c0_19 = arith.constant 0 : index
    %11 = vector.load %arg9[%c0_18, %c1, %c0_19] : memref<18x3x1xbf16, #tpu.memory_space<vmem>>, vector<16x1x1xbf16>
    %12 = vector.shape_cast %11 : vector<16x1x1xbf16> to vector<16x1xbf16>
    %c1_20 = arith.constant 1 : index
    %c0_21 = arith.constant 0 : index
    %c0_22 = arith.constant 0 : index
    %13 = vector.load %arg4[%c1_20, %c0_21, %c0_22] : memref<9x1x1xbf16, #tpu.memory_space<vmem>>, vector<1x1x1xbf16>
    %14 = vector.shape_cast %13 : vector<1x1x1xbf16> to vector<1x1xbf16>
    %cst_23 = arith.constant dense<0.000000e+00> : vector<16x1xf32>
    %15 = tpu.matmul %12, %14, %cst_23 {dimension_numbers = #tpu.dot_dimension_numbers<[1], [0], [0], [1], [0, 0, 1, 1], [], []>} : vector<16x1xbf16>, vector<1x1xbf16>, vector<16x1xf32> -> vector<16x1xf32>
    %16 = arith.addf %10, %15 : vector<16x1xf32>
    %c0_24 = arith.constant 0 : index
    %c2 = arith.constant 2 : index
    %c0_25 = arith.constant 0 : index
    %17 = vector.load %arg9[%c0_24, %c2, %c0_25] : memref<18x3x1xbf16, #tpu.memory_space<vmem>>, vector<16x1x1xbf16>
    %18 = vector.shape_cast %17 : vector<16x1x1xbf16> to vector<16x1xbf16>
    %c2_26 = arith.constant 2 : index
    %c0_27 = arith.constant 0 : index
    %c0_28 = arith.constant 0 : index
    %19 = vector.load %arg4[%c2_26, %c0_27, %c0_28] : memref<9x1x1xbf16, #tpu.memory_space<vmem>>, vector<1x1x1xbf16>
    %20 = vector.shape_cast %19 : vector<1x1x1xbf16> to vector<1x1xbf16>
    %cst_29 = arith.constant dense<0.000000e+00> : vector<16x1xf32>
    %21 = tpu.matmul %18, %20, %cst_29 {dimension_numbers = #tpu.dot_dimension_numbers<[1], [0], [0], [1], [0, 0, 1, 1], [], []>} : vector<16x1xbf16>, vector<1x1xbf16>, vector<16x1xf32> -> vector<16x1xf32>
    %22 = arith.addf %16, %21 : vector<16x1xf32>
    %c1_30 = arith.constant 1 : index
    %c0_31 = arith.constant 0 : index
    %c0_32 = arith.constant 0 : index
    %23 = vector.load %arg9[%c1_30, %c0_31, %c0_32] : memref<18x3x1xbf16, #tpu.memory_space<vmem>>, vector<16x1x1xbf16>
    %24 = vector.shape_cast %23 : vector<16x1x1xbf16> to vector<16x1xbf16>
    %c3 = arith.constant 3 : index
    %c0_33 = arith.constant 0 : index
    %c0_34 = arith.constant 0 : index
    %25 = vector.load %arg4[%c3, %c0_33, %c0_34] : memref<9x1x1xbf16, #tpu.memory_space<vmem>>, vector<1x1x1xbf16>
    %26 = vector.shape_cast %25 : vector<1x1x1xbf16> to vector<1x1xbf16>
    %cst_35 = arith.constant dense<0.000000e+00> : vector<16x1xf32>
    %27 = tpu.matmul %24, %26, %cst_35 {dimension_numbers = #tpu.dot_dimension_numbers<[1], [0], [0], [1], [0, 0, 1, 1], [], []>} : vector<16x1xbf16>, vector<1x1xbf16>, vector<16x1xf32> -> vector<16x1xf32>
    %28 = arith.addf %22, %27 : vector<16x1xf32>
    %c1_36 = arith.constant 1 : index
    %c1_37 = arith.constant 1 : index
    %c0_38 = arith.constant 0 : index
    %29 = vector.load %arg9[%c1_36, %c1_37, %c0_38] : memref<18x3x1xbf16, #tpu.memory_space<vmem>>, vector<16x1x1xbf16>
    %30 = vector.shape_cast %29 : vector<16x1x1xbf16> to vector<16x1xbf16>
    %c4 = arith.constant 4 : index
    %c0_39 = arith.constant 0 : index
    %c0_40 = arith.constant 0 : index
    %31 = vector.load %arg4[%c4, %c0_39, %c0_40] : memref<9x1x1xbf16, #tpu.memory_space<vmem>>, vector<1x1x1xbf16>
    %32 = vector.shape_cast %31 : vector<1x1x1xbf16> to vector<1x1xbf16>
    %cst_41 = arith.constant dense<0.000000e+00> : vector<16x1xf32>
    %33 = tpu.matmul %30, %32, %cst_41 {dimension_numbers = #tpu.dot_dimension_numbers<[1], [0], [0], [1], [0, 0, 1, 1], [], []>} : vector<16x1xbf16>, vector<1x1xbf16>, vector<16x1xf32> -> vector<16x1xf32>
    %34 = arith.addf %28, %33 : vector<16x1xf32>
    %c1_42 = arith.constant 1 : index
    %c2_43 = arith.constant 2 : index
    %c0_44 = arith.constant 0 : index
    %35 = vector.load %arg9[%c1_42, %c2_43, %c0_44] : memref<18x3x1xbf16, #tpu.memory_space<vmem>>, vector<16x1x1xbf16>
    %36 = vector.shape_cast %35 : vector<16x1x1xbf16> to vector<16x1xbf16>
    %c5 = arith.constant 5 : index
    %c0_45 = arith.constant 0 : index
    %c0_46 = arith.constant 0 : index
    %37 = vector.load %arg4[%c5, %c0_45, %c0_46] : memref<9x1x1xbf16, #tpu.memory_space<vmem>>, vector<1x1x1xbf16>
    %38 = vector.shape_cast %37 : vector<1x1x1xbf16> to vector<1x1xbf16>
    %cst_47 = arith.constant dense<0.000000e+00> : vector<16x1xf32>
    %39 = tpu.matmul %36, %38, %cst_47 {dimension_numbers = #tpu.dot_dimension_numbers<[1], [0], [0], [1], [0, 0, 1, 1], [], []>} : vector<16x1xbf16>, vector<1x1xbf16>, vector<16x1xf32> -> vector<16x1xf32>
    %40 = arith.addf %34, %39 : vector<16x1xf32>
    %c2_48 = arith.constant 2 : index
    %c0_49 = arith.constant 0 : index
    %c0_50 = arith.constant 0 : index
    %41 = vector.load %arg9[%c2_48, %c0_49, %c0_50] : memref<18x3x1xbf16, #tpu.memory_space<vmem>>, vector<16x1x1xbf16>
    %42 = vector.shape_cast %41 : vector<16x1x1xbf16> to vector<16x1xbf16>
    %c6 = arith.constant 6 : index
    %c0_51 = arith.constant 0 : index
    %c0_52 = arith.constant 0 : index
    %43 = vector.load %arg4[%c6, %c0_51, %c0_52] : memref<9x1x1xbf16, #tpu.memory_space<vmem>>, vector<1x1x1xbf16>
    %44 = vector.shape_cast %43 : vector<1x1x1xbf16> to vector<1x1xbf16>
    %cst_53 = arith.constant dense<0.000000e+00> : vector<16x1xf32>
    %45 = tpu.matmul %42, %44, %cst_53 {dimension_numbers = #tpu.dot_dimension_numbers<[1], [0], [0], [1], [0, 0, 1, 1], [], []>} : vector<16x1xbf16>, vector<1x1xbf16>, vector<16x1xf32> -> vector<16x1xf32>
    %46 = arith.addf %40, %45 : vector<16x1xf32>
    %c2_54 = arith.constant 2 : index
    %c1_55 = arith.constant 1 : index
    %c0_56 = arith.constant 0 : index
    %47 = vector.load %arg9[%c2_54, %c1_55, %c0_56] : memref<18x3x1xbf16, #tpu.memory_space<vmem>>, vector<16x1x1xbf16>
    %48 = vector.shape_cast %47 : vector<16x1x1xbf16> to vector<16x1xbf16>
    %c7 = arith.constant 7 : index
    %c0_57 = arith.constant 0 : index
    %c0_58 = arith.constant 0 : index
    %49 = vector.load %arg4[%c7, %c0_57, %c0_58] : memref<9x1x1xbf16, #tpu.memory_space<vmem>>, vector<1x1x1xbf16>
    %50 = vector.shape_cast %49 : vector<1x1x1xbf16> to vector<1x1xbf16>
    %cst_59 = arith.constant dense<0.000000e+00> : vector<16x1xf32>
    %51 = tpu.matmul %48, %50, %cst_59 {dimension_numbers = #tpu.dot_dimension_numbers<[1], [0], [0], [1], [0, 0, 1, 1], [], []>} : vector<16x1xbf16>, vector<1x1xbf16>, vector<16x1xf32> -> vector<16x1xf32>
    %52 = arith.addf %46, %51 : vector<16x1xf32>
    %c2_60 = arith.constant 2 : index
    %c2_61 = arith.constant 2 : index
    %c0_62 = arith.constant 0 : index
    %53 = vector.load %arg9[%c2_60, %c2_61, %c0_62] : memref<18x3x1xbf16, #tpu.memory_space<vmem>>, vector<16x1x1xbf16>
    %54 = vector.shape_cast %53 : vector<16x1x1xbf16> to vector<16x1xbf16>
    %c8 = arith.constant 8 : index
    %c0_63 = arith.constant 0 : index
    %c0_64 = arith.constant 0 : index
    %55 = vector.load %arg4[%c8, %c0_63, %c0_64] : memref<9x1x1xbf16, #tpu.memory_space<vmem>>, vector<1x1x1xbf16>
    %56 = vector.shape_cast %55 : vector<1x1x1xbf16> to vector<1x1xbf16>
    %cst_65 = arith.constant dense<0.000000e+00> : vector<16x1xf32>
    %57 = tpu.matmul %54, %56, %cst_65 {dimension_numbers = #tpu.dot_dimension_numbers<[1], [0], [0], [1], [0, 0, 1, 1], [], []>} : vector<16x1xbf16>, vector<1x1xbf16>, vector<16x1xf32> -> vector<16x1xf32>
    %58 = arith.addf %52, %57 : vector<16x1xf32>
    %c0_66 = arith.constant 0 : index
    %c0_67 = arith.constant 0 : index
    %59 = vector.load %arg5[%c0_66, %c0_67] : memref<1x1xf32, #tpu.memory_space<vmem>>, vector<1x1xf32>
    %60 = vector.broadcast %59 : vector<1x1xf32> to vector<16x1xf32>
    %61 = arith.addf %58, %60 : vector<16x1xf32>
    %cst_68 = arith.constant dense<0.000000e+00> : vector<16xf32>
    %62 = vector.multi_reduction <add>, %61, %cst_68 [1] : vector<16x1xf32> to vector<16xf32>
    %63 = vector.shape_cast %62 : vector<16xf32> to vector<16x1xf32>
    %cst_69 = arith.constant 1.000000e+00 : f32
    %64 = vector.broadcast %cst_69 : f32 to vector<16x1xf32>
    %65 = arith.divf %63, %64 : vector<16x1xf32>
    %66 = arith.subf %61, %65 : vector<16x1xf32>
    %67 = arith.mulf %66, %66 : vector<16x1xf32>
    %cst_70 = arith.constant dense<0.000000e+00> : vector<16xf32>
    %68 = vector.multi_reduction <add>, %67, %cst_70 [1] : vector<16x1xf32> to vector<16xf32>
    %69 = vector.shape_cast %68 : vector<16xf32> to vector<16x1xf32>
    %cst_71 = arith.constant 1.000000e+00 : f32
    %70 = vector.broadcast %cst_71 : f32 to vector<16x1xf32>
    %71 = arith.divf %69, %70 : vector<16x1xf32>
    %72 = arith.subf %61, %65 : vector<16x1xf32>
    %cst_72 = arith.constant 9.99999974E-6 : f32
    %73 = vector.broadcast %cst_72 : f32 to vector<16x1xf32>
    %74 = arith.addf %71, %73 : vector<16x1xf32>
    %75 = math.rsqrt %74 : vector<16x1xf32>
    %76 = arith.mulf %72, %75 : vector<16x1xf32>
    %c0_73 = arith.constant 0 : index
    %c0_74 = arith.constant 0 : index
    %77 = vector.load %arg6[%c0_73, %c0_74] : memref<1x1xf32, #tpu.memory_space<vmem>>, vector<1x1xf32>
    %78 = vector.broadcast %77 : vector<1x1xf32> to vector<16x1xf32>
    %79 = arith.mulf %76, %78 : vector<16x1xf32>
    %c0_75 = arith.constant 0 : index
    %c0_76 = arith.constant 0 : index
    %80 = vector.load %arg7[%c0_75, %c0_76] : memref<1x1xf32, #tpu.memory_space<vmem>>, vector<1x1xf32>
    %81 = vector.broadcast %80 : vector<1x1xf32> to vector<16x1xf32>
    %82 = arith.addf %79, %81 : vector<16x1xf32>
    %c0_77 = arith.constant 0 : index
    %c0_78 = arith.constant 0 : index
    %c0_79 = arith.constant 0 : index
    %83 = vector.load %arg8[%c0_77, %c0_78, %c0_79] : memref<1x16x1xf32, #tpu.memory_space<vmem>>, vector<1x16x1xf32>
    %84 = vector.shape_cast %83 : vector<1x16x1xf32> to vector<16x1xf32>
    %85 = vector.shape_cast %82 : vector<16x1xf32> to vector<1x16x1xf32>
    tpu.vector_store %arg8[%c0_77, %c0_78, %c0_79], %85 {strides = array<i32>} : memref<1x16x1xf32, #tpu.memory_space<vmem>>, vector<1x16x1xf32>,
    return
  }
  func.func @transform_0(%arg0: i32, %arg1: i32) -> (i32, i32, i32, i32) {
    %c0_i32 = arith.constant 0 : i32
    %c0_i32_0 = arith.constant 0 : i32
    %c0_i32_1 = arith.constant 0 : i32
    return %arg0, %arg1, %c0_i32, %c0_i32_0 : i32, i32, i32, i32
  }
  func.func @transform_1(%arg0: i32, %arg1: i32) -> (i32, i32, i32, i32) {
    %c1_i32 = arith.constant 1 : i32
    %0 = arith.addi %arg1, %c1_i32 : i32
    %c8_i32 = arith.constant 8 : i32
    %1 = arith.muli %0, %c8_i32 : i32
    %c0_i32 = arith.constant 0 : i32
    %c0_i32_0 = arith.constant 0 : i32
    %c0_i32_1 = arith.constant 0 : i32
    return %arg0, %1, %c0_i32, %c0_i32_0 : i32, i32, i32, i32
  }
  func.func @transform_2(%arg0: i32, %arg1: i32) -> (i32, i32, i32) {
    %c0_i32 = arith.constant 0 : i32
    %c0_i32_0 = arith.constant 0 : i32
    %c0_i32_1 = arith.constant 0 : i32
    %c0_i32_2 = arith.constant 0 : i32
    return %c0_i32, %c0_i32_0, %c0_i32_1 : i32, i32, i32
  }
  func.func @transform_3(%arg0: i32, %arg1: i32) -> (i32, i32) {
    %c0_i32 = arith.constant 0 : i32
    %c0_i32_0 = arith.constant 0 : i32
    %c0_i32_1 = arith.constant 0 : i32
    return %c0_i32, %c0_i32_0 : i32, i32
  }
  func.func @transform_4(%arg0: i32, %arg1: i32) -> (i32, i32) {
    %c0_i32 = arith.constant 0 : i32
    %c0_i32_0 = arith.constant 0 : i32
    %c0_i32_1 = arith.constant 0 : i32
    return %c0_i32, %c0_i32_0 : i32, i32
  }
  func.func @transform_5(%arg0: i32, %arg1: i32) -> (i32, i32) {
    %c0_i32 = arith.constant 0 : i32
    %c0_i32_0 = arith.constant 0 : i32
    %c0_i32_1 = arith.constant 0 : i32
    return %c0_i32, %c0_i32_0 : i32, i32
  }
  func.func @transform_6(%arg0: i32, %arg1: i32) -> (i32, i32, i32) {
    %c0_i32 = arith.constant 0 : i32
    %c0_i32_0 = arith.constant 0 : i32
    return %arg0, %arg1, %c0_i32 : i32, i32, i32
  }
}

</mosaic_0001>

<llo_original>
// kernel: tpu_custom_call.1
$region0: #{tpu_custom_call.1}
  #allocation0 [shape = 'u32[]', space=smem, size = 0x4, offset = 0x4, fixed_abs, tag = 'smem constant byte address 0x4 - core index']
  #allocation1 [shape = 'u32[144,128]{1,0:T(1,128)}', space=vmem, size = 0x12000, scoped, tag = 'internal scratch']
  #allocation2 [shape = 'bf16[18,3,1]{2,1,0:T(4,128)(2,1)}', space=vmem, size = 0x4800, scoped, tag = 'scratch operand']
  #allocation3 [shape = 'f32[1,1]{1,0:T(1,128)S(1)}', space=vmem, size = 0x200, scoped, tag = 'scoped memory for tpu_custom_call.1']
  #allocation4 [shape = 'f32[1,1]{1,0:T(1,128)S(1)}', space=vmem, size = 0x200, scoped, tag = 'scoped memory for tpu_custom_call.1']
  #allocation5 [shape = 'f32[1,1]{1,0:T(1,128)S(1)}', space=vmem, size = 0x200, scoped, tag = 'scoped memory for tpu_custom_call.1']
  %s0 = inlined_call_operand.vmem [shape: bf16[2,18,3,1], index: 0, kind: input, shape index: {}]
  %s1 = inlined_call_operand.vmem [shape: bf16[2,18,3,1], index: 1, kind: input, shape index: {}]
  %s2 = inlined_call_operand.vmem [shape: bf16[9,1,1], index: 2, kind: input, shape index: {}]
  %s3 = inlined_call_operand.<no memory space> [shape: f32[1,1], index: 3, kind: input, shape index: {}]
  %s4 = inlined_call_operand.<no memory space> [shape: f32[1,1], index: 4, kind: input, shape index: {}]
  %s5 = inlined_call_operand.<no memory space> [shape: f32[1,1], index: 5, kind: input, shape index: {}]
  %s6 = inlined_call_operand.vmem [shape: f32[2,16,1], index: 6, kind: output, shape index: {}]
  %s7 = sld [smem:[#allocation0]]
  $region57: #{tpu_custom_call.1} parent=0
    _
  %s9 = ssub.s32 1, %s7
  %s10 = scalar_select 0, %s9, %s7
  %v11 = vstv %s3
  %12 = vst [vmem:[#allocation3] sm:$0x1] %v11
  %v13 = vstv %s4
  %14 = vst [vmem:[#allocation4] sm:$0x1] %v13
  %v15 = vstv %s5
  %16 = vst [vmem:[#allocation5] sm:$0x1] %v15
  loop: start=0, step=1, limit=4
  $region2: #{tpu_custom_call.1} parent=0 // loop_pre_header
    _
  $region3: #{tpu_custom_call.1} parent=0 // loop_header
    %s18 = sphi 0, %s22
    %p19 = scmp.ge.s32.totalorder %s18, 4
    %s25 = sphi 0, %s37
    %s26 = sphi 0, %s33
    %s27 = sphi 0, %s25
    %s28 = sphi 0, %s26
    %s29 = sphi 0, %s27
    %s30 = sphi 0, %s28
    %s42 = sphi 0, %s44
    %s45 = sphi 0, %s42
    %s46 = sphi 0, %s45
    %s62 = sphi 0, %s46
    %s74 = sphi 0, %s76
    %s77 = sphi 0, %s74
    %s78 = sphi 0, %s77
    %s94 = sphi 0, %s78
    %s98 = sphi 0, %s98
    %s100 = sphi 0, %s98
    %s101 = sphi 0, %s100
    %s115 = sphi 0, %s101
    %s119 = sphi 0, %s119
    %s121 = sphi 0, %s119
    %s122 = sphi 0, %s121
    %s136 = sphi 0, %s122
    %s140 = sphi 0, %s140
    %s142 = sphi 0, %s140
    %s143 = sphi 0, %s142
    %s157 = sphi 0, %s143
    %s161 = sphi 0, %s161
    %s163 = sphi 0, %s161
    %s164 = sphi 0, %s163
    %s178 = sphi 0, %s164
    %s186 = sphi 0, %s188
    %s189 = sphi 0, %s186
    %s190 = sphi 0, %s189
    %s206 = sphi 0, %s190
  $region4: #{tpu_custom_call.1} parent=0 // loop_header_branch
    %21 = sbr.rel (%p19) target = $region8
  $region5: #{tpu_custom_call.1} parent=0 // loop_body
    %s23 = ssub.s32 %s18, 1
    %s24 = ssub.s32 %s18, 2
    %s31 = sadd.s32 1, %s26
    %p32 = scmp.ge.s32.totalorder %s31, 1
    %s33 = scalar_select %p32, 0, %s31
    %s34 = sadd.s32 1, %s25
    %s35 = scalar_select %p32, %s34, %s25
    %p36 = scmp.ge.s32.totalorder %s35, 2
    %s37 = scalar_select %p36, 0, %s35
    %s38 = ssub.s32 %s25, %s37
    %s39 = ssub.s32 %s26, %s33
    %s40 = sor.u32 %s38, %s39
    %p41 = scmp.eq.s32.totalorder %s40, 0
    %s43 = sadd.s32 %s42, 1
    %s44 = scalar_select %p41, %s42, %s43
    %p47 = pneg %p41
    %p48 = scmp.eq.s32.totalorder %s18, 1
    %p49 = por %p47, %p48
    %p50 = scmp.ne.s32.totalorder %s42, %s45
    %p51 = scmp.eq.s32.totalorder %s18, 0
    %p52 = por %p50, %p51
    %p53 = scmp.ne.s32.totalorder %s42, %s45
    %p54 = scmp.eq.s32.totalorder %s23, 1
    %p55 = por %p53, %p54
    %p56 = scmp.ne.s32.totalorder %s45, %s46
    %p57 = scmp.eq.s32.totalorder %s23, 0
    %p58 = por %p56, %p57
    %p59 = scmp.ne.s32.totalorder %s45, %s46
    %p60 = scmp.eq.s32.totalorder %s24, 1
    %p61 = por %p59, %p60
    %p63 = scmp.ne.s32.totalorder %s46, %s62
    %p64 = scmp.eq.s32.totalorder %s24, 0
    %p65 = por %p63, %p64
    %s66 = sadd.s32 %s26, 1
    %s67 = smul.u32 %s66, 8
    %s68 = sadd.s32 %s33, 1
    %s69 = smul.u32 %s68, 8
    %s70 = ssub.s32 %s25, %s37
    %s71 = ssub.s32 %s67, %s69
    %s72 = sor.u32 %s70, %s71
    %p73 = scmp.eq.s32.totalorder %s72, 0
    %s75 = sadd.s32 %s74, 1
    %s76 = scalar_select %p73, %s74, %s75
    %p79 = pneg %p73
    %p80 = scmp.eq.s32.totalorder %s18, 1
    %p81 = por %p79, %p80
    %p82 = scmp.ne.s32.totalorder %s74, %s77
    %p83 = scmp.eq.s32.totalorder %s18, 0
    %p84 = por %p82, %p83
    %p85 = scmp.ne.s32.totalorder %s74, %s77
    %p86 = scmp.eq.s32.totalorder %s23, 1
    %p87 = por %p85, %p86
    %p88 = scmp.ne.s32.totalorder %s77, %s78
    %p89 = scmp.eq.s32.totalorder %s23, 0
    %p90 = por %p88, %p89
    %p91 = scmp.ne.s32.totalorder %s77, %s78
    %p92 = scmp.eq.s32.totalorder %s24, 1
    %p93 = por %p91, %p92
    %p95 = scmp.ne.s32.totalorder %s78, %s94
    %p96 = scmp.eq.s32.totalorder %s24, 0
    %p97 = por %p95, %p96
    %s99 = sadd.s32 %s98, 1
    %p102 = scmp.eq.s32.totalorder %s18, 1
    %p103 = scmp.ne.s32.totalorder %s98, %s100
    %p104 = scmp.eq.s32.totalorder %s18, 0
    %p105 = por %p103, %p104
    %p106 = scmp.ne.s32.totalorder %s98, %s100
    %p107 = scmp.eq.s32.totalorder %s23, 1
    %p108 = por %p106, %p107
    %p109 = scmp.ne.s32.totalorder %s100, %s101
    %p110 = scmp.eq.s32.totalorder %s23, 0
    %p111 = por %p109, %p110
    %p112 = scmp.ne.s32.totalorder %s100, %s101
    %p113 = scmp.eq.s32.totalorder %s24, 1
    %p114 = por %p112, %p113
    %p116 = scmp.ne.s32.totalorder %s101, %s115
    %p117 = scmp.eq.s32.totalorder %s24, 0
    %p118 = por %p116, %p117
    %s120 = sadd.s32 %s119, 1
    %p123 = scmp.eq.s32.totalorder %s18, 1
    %p124 = scmp.ne.s32.totalorder %s119, %s121
    %p125 = scmp.eq.s32.totalorder %s18, 0
    %p126 = por %p124, %p125
    %p127 = scmp.ne.s32.totalorder %s119, %s121
    %p128 = scmp.eq.s32.totalorder %s23, 1
    %p129 = por %p127, %p128
    %p130 = scmp.ne.s32.totalorder %s121, %s122
    %p131 = scmp.eq.s32.totalorder %s23, 0
    %p132 = por %p130, %p131
    %p133 = scmp.ne.s32.totalorder %s121, %s122
    %p134 = scmp.eq.s32.totalorder %s24, 1
    %p135 = por %p133, %p134
    %p137 = scmp.ne.s32.totalorder %s122, %s136
    %p138 = scmp.eq.s32.totalorder %s24, 0
    %p139 = por %p137, %p138
    %s141 = sadd.s32 %s140, 1
    %p144 = scmp.eq.s32.totalorder %s18, 1
    %p145 = scmp.ne.s32.totalorder %s140, %s142
    %p146 = scmp.eq.s32.totalorder %s18, 0
    %p147 = por %p145, %p146
    %p148 = scmp.ne.s32.totalorder %s140, %s142
    %p149 = scmp.eq.s32.totalorder %s23, 1
    %p150 = por %p148, %p149
    %p151 = scmp.ne.s32.totalorder %s142, %s143
    %p152 = scmp.eq.s32.totalorder %s23, 0
    %p153 = por %p151, %p152
    %p154 = scmp.ne.s32.totalorder %s142, %s143
    %p155 = scmp.eq.s32.totalorder %s24, 1
    %p156 = por %p154, %p155
    %p158 = scmp.ne.s32.totalorder %s143, %s157
    %p159 = scmp.eq.s32.totalorder %s24, 0
    %p160 = por %p158, %p159
    %s162 = sadd.s32 %s161, 1
    %p165 = scmp.eq.s32.totalorder %s18, 1
    %p166 = scmp.ne.s32.totalorder %s161, %s163
    %p167 = scmp.eq.s32.totalorder %s18, 0
    %p168 = por %p166, %p167
    %p169 = scmp.ne.s32.totalorder %s161, %s163
    %p170 = scmp.eq.s32.totalorder %s23, 1
    %p171 = por %p169, %p170
    %p172 = scmp.ne.s32.totalorder %s163, %s164
    %p173 = scmp.eq.s32.totalorder %s23, 0
    %p174 = por %p172, %p173
    %p175 = scmp.ne.s32.totalorder %s163, %s164
    %p176 = scmp.eq.s32.totalorder %s24, 1
    %p177 = por %p175, %p176
    %p179 = scmp.ne.s32.totalorder %s164, %s178
    %p180 = scmp.eq.s32.totalorder %s24, 0
    %p181 = por %p179, %p180
    %s182 = ssub.s32 %s25, %s37
    %s183 = ssub.s32 %s26, %s33
    %s184 = sor.u32 %s182, %s183
    %p185 = scmp.eq.s32.totalorder %s184, 0
    %s187 = sadd.s32 %s186, 1
    %s188 = scalar_select %p185, %s186, %s187
    %p191 = pneg %p185
    %p192 = scmp.eq.s32.totalorder %s18, 1
    %p193 = por %p191, %p192
    %p194 = scmp.ne.s32.totalorder %s186, %s189
    %p195 = scmp.eq.s32.totalorder %s18, 0
    %p196 = por %p194, %p195
    %p197 = scmp.ne.s32.totalorder %s186, %s189
    %p198 = scmp.eq.s32.totalorder %s23, 1
    %p199 = por %p197, %p198
    %p200 = scmp.ne.s32.totalorder %s189, %s190
    %p201 = scmp.eq.s32.totalorder %s23, 0
    %p202 = por %p200, %p201
    %p203 = scmp.ne.s32.totalorder %s189, %s190
    %p204 = scmp.eq.s32.totalorder %s24, 1
    %p205 = por %p203, %p204
    %p207 = scmp.ne.s32.totalorder %s190, %s206
    %p208 = scmp.eq.s32.totalorder %s24, 0
    %p209 = por %p207, %p208
    %p210 = scmp.le.s32.totalorder 1, %s18
    %p211 = scmp.lt.s32.totalorder %s18, 3
    %p212 = pnand %p210, %p211
    %p213 = pneg %p212
    // Predicated region
    $region9: #{tpu_custom_call.1} parent=5 // pred_check
      _
    $region10: #{tpu_custom_call.1} parent=5 // pred_check_branch
      %215 = sbr.rel (%p212) target = $region12
    $region11: #{tpu_custom_call.1} parent=5 // pred_region
      %s216 = ssub.s32 %s18, 1
      // Predicated region
      $region13: #{tpu_custom_call.1} parent=11 // pred_check
        %p217 = pneg %p111
      $region14: #{tpu_custom_call.1} parent=11 // pred_check_branch
        %219 = sbr.rel (%p217) target = $region16
      $region15: #{tpu_custom_call.1} parent=11 // pred_region
        _
      $region16: #{tpu_custom_call.1} parent=11 // pred_fallthru
        _
      // Predicated region
      $region17: #{tpu_custom_call.1} parent=11 // pred_check
        %p220 = pneg %p132
      $region18: #{tpu_custom_call.1} parent=11 // pred_check_branch
        %222 = sbr.rel (%p220) target = $region20
      $region19: #{tpu_custom_call.1} parent=11 // pred_region
        _
      $region20: #{tpu_custom_call.1} parent=11 // pred_fallthru
        _
      // Predicated region
      $region21: #{tpu_custom_call.1} parent=11 // pred_check
        %p223 = pneg %p153
      $region22: #{tpu_custom_call.1} parent=11 // pred_check_branch
        %225 = sbr.rel (%p223) target = $region24
      $region23: #{tpu_custom_call.1} parent=11 // pred_region
        _
      $region24: #{tpu_custom_call.1} parent=11 // pred_fallthru
        _
      // Predicated region
      $region25: #{tpu_custom_call.1} parent=11 // pred_check
        %p226 = pneg %p174
      $region26: #{tpu_custom_call.1} parent=11 // pred_check_branch
        %228 = sbr.rel (%p226) target = $region28
      $region27: #{tpu_custom_call.1} parent=11 // pred_region
        _
      $region28: #{tpu_custom_call.1} parent=11 // pred_fallthru
        _
    $region12: #{tpu_custom_call.1} parent=5 // pred_fallthru
      _
    %p229 = scmp.lt.s32.totalorder %s18, 2
    // Predicated region
    $region29: #{tpu_custom_call.1} parent=5 // pred_check
      %p230 = pneg %p229
    $region30: #{tpu_custom_call.1} parent=5 // pred_check_branch
      %232 = sbr.rel (%p230) target = $region32
    $region31: #{tpu_custom_call.1} parent=5 // pred_region
      // Predicated region
      $region33: #{tpu_custom_call.1} parent=31 // pred_check
        %p233 = pneg %p52
      $region34: #{tpu_custom_call.1} parent=31 // pred_check_branch
        %235 = sbr.rel (%p233) target = $region36
      $region35: #{tpu_custom_call.1} parent=31 // pred_region
        %s236 = smul.u32 16, %s26
        %s237 = ssub.s32 18, %s236
        %p238 = scmp.lt.s32.totalorder %s237, 16
        %s239 = scalar_select %p238, %s237, 16
        %s240 = smul.u32 32, %s239
        %p241 = scmp.lt.s32.totalorder %s25, 1
        %s242 = scalar_select %p241, %s25, 1
        %p243 = scmp.lt.s32.totalorder %s236, 17
        %s244 = scalar_select %p243, %s236, 17
        %s245 = smul.addr %s242, 18
        %s246 = sadd.s32 %s244, %s245
        %s247 = smul.addr %s246, 2
        %s248 = scalar_lea.vmem %s0, %s247
        %s249 = smul.u32 16, %s26
        %s250 = ssub.s32 18, %s249
        %p251 = scmp.lt.s32.totalorder %s250, 16
        %s252 = scalar_select %p251, %s250, 16
        %s253 = smul.u32 32, %s252
      $region36: #{tpu_custom_call.1} parent=31 // pred_fallthru
        _
      // Predicated region
      $region37: #{tpu_custom_call.1} parent=31 // pred_check
        %p254 = pneg %p84
      $region38: #{tpu_custom_call.1} parent=31 // pred_check_branch
        %256 = sbr.rel (%p254) target = $region40
      $region39: #{tpu_custom_call.1} parent=31 // pred_region
        %s257 = sadd.s32 %s26, 1
        %s258 = smul.u32 %s257, 8
        %s259 = smul.u32 2, %s258
        %p260 = scmp.lt.s32.totalorder %s25, 1
        %s261 = scalar_select %p260, %s25, 1
        %p262 = scmp.lt.s32.totalorder %s259, 17
        %s263 = scalar_select %p262, %s259, 17
        %s264 = smul.addr %s261, 18
        %s265 = sadd.s32 %s263, %s264
        %s266 = smul.addr %s265, 2
        %s267 = scalar_lea.vmem %s1, %s266
        %s268 = sadd.s32 %s26, 1
        %s269 = smul.u32 %s268, 8
        %s270 = smul.u32 2, %s269
      $region40: #{tpu_custom_call.1} parent=31 // pred_fallthru
        _
    $region32: #{tpu_custom_call.1} parent=5 // pred_fallthru
      _
    %p271 = scmp.le.s32.totalorder 1, %s18
    %p272 = scmp.lt.s32.totalorder %s18, 3
    %p273 = pnand %p271, %p272
    %p274 = pneg %p273
    // Predicated region
    $region41: #{tpu_custom_call.1} parent=5 // pred_check
      _
    $region42: #{tpu_custom_call.1} parent=5 // pred_check_branch
      %276 = sbr.rel (%p273) target = $region44
    $region43: #{tpu_custom_call.1} parent=5 // pred_region
      %s277 = ssub.s32 %s18, 1
      %s278 = smul.u32 16, %s28
      %s279 = ssub.s32 18, %s278
      %p280 = scmp.lt.s32.totalorder %s279, 16
      %s281 = scalar_select %p280, %s279, 16
      %s282 = smul.u32 32, %s281
      %p283 = scmp.lt.s32.totalorder %s27, 1
      %s284 = scalar_select %p283, %s27, 1
      %p285 = scmp.lt.s32.totalorder %s278, 17
      %s286 = scalar_select %p285, %s278, 17
      %s287 = smul.addr %s284, 18
      %s288 = sadd.s32 %s286, %s287
      %s289 = smul.addr %s288, 2
      %s290 = scalar_lea.vmem %s0, %s289
      %p291 = pneg %p58
      %p292 = pneg %p55
      %s293 = sadd.s32 %s28, 1
      %s294 = smul.u32 %s293, 8
      %s295 = smul.u32 2, %s294
      %p296 = scmp.lt.s32.totalorder %s27, 1
      %s297 = scalar_select %p296, %s27, 1
      %p298 = scmp.lt.s32.totalorder %s295, 17
      %s299 = scalar_select %p298, %s295, 17
      %s300 = smul.addr %s297, 18
      %s301 = sadd.s32 %s299, %s300
      %s302 = smul.addr %s301, 2
      %s303 = scalar_lea.vmem %s1, %s302
      %p304 = pneg %p90
      %p305 = pneg %p87
      %p306 = pneg %p111
      %p307 = pneg %p108
      %p308 = pneg %p132
      %p309 = pneg %p129
      %p310 = pneg %p153
      %p311 = pneg %p150
      %p312 = pneg %p174
      %p313 = pneg %p171
      %p314 = pneg %p202
      %p315 = pneg %p199
      %s316 = smul.u32 2, %s28
      %p317 = scmp.lt.s32.totalorder %s27, 1
      %s318 = scalar_select %p317, %s27, 1
      %p319 = scmp.lt.s32.totalorder %s316, 1
      %s320 = scalar_select %p319, %s316, 1
      %s321 = smul.addr %s318, 2
      %s322 = sadd.s32 %s320, %s321
      %s323 = smul.addr %s322, 8
      %s324 = scalar_lea.vmem %s6, %s323
      %s325 = smul.u32 16, %s28
      %s326 = ssub.s32 18, %s325
      %p327 = scmp.lt.s32.totalorder %s326, 16
      %s328 = scalar_select %p327, %s326, 16
      %s329 = smul.u32 32, %s328
      %p330 = scmp.lt.s32.totalorder %s27, 1
      %s331 = scalar_select %p330, %s27, 1
      %p332 = scmp.lt.s32.totalorder %s325, 17
      %s333 = scalar_select %p332, %s325, 17
      %s334 = smul.addr %s331, 18
      %s335 = sadd.s32 %s333, %s334
      %s336 = smul.addr %s335, 2
      %s337 = scalar_lea.vmem %s0, %s336
      %s338 = smul.u32 16, %s28
      %s339 = ssub.s32 18, %s338
      %p340 = scmp.lt.s32.totalorder %s339, 16
      %s341 = scalar_select %p340, %s339, 16
      %s342 = smul.u32 32, %s341
      %s343 = sadd.s32 %s28, 1
      %s344 = smul.u32 %s343, 8
      %s345 = smul.u32 2, %s344
      %p346 = scmp.lt.s32.totalorder %s27, 1
      %s347 = scalar_select %p346, %s27, 1
      %p348 = scmp.lt.s32.totalorder %s345, 17
      %s349 = scalar_select %p348, %s345, 17
      %s350 = smul.addr %s347, 18
      %s351 = sadd.s32 %s349, %s350
      %s352 = smul.addr %s351, 2
      %s353 = scalar_lea.vmem %s1, %s352
      %s354 = sadd.s32 %s28, 1
      %s355 = smul.u32 %s354, 8
      %s356 = smul.u32 2, %s355
      %s357 = smul.u32 2, %s28
      %p358 = scmp.lt.s32.totalorder %s27, 1
      %s359 = scalar_select %p358, %s27, 1
      %p360 = scmp.lt.s32.totalorder %s357, 1
      %s361 = scalar_select %p360, %s357, 1
      %s362 = smul.addr %s359, 2
      %s363 = sadd.s32 %s361, %s362
      %s364 = smul.addr %s363, 8
      %s365 = scalar_lea.vmem %s6, %s364
      %s366 = smul.u32 2, %s28
      %v368 = vld [vmem:[%s337] sm:$0x3]
      %v369 = vld [vmem:[%s337 + $0x2] sm:$0x3]
      %v370 = vld [vmem:[%s337 + $0x4] sm:$0x3]
      %v371 = vld [vmem:[%s337 + $0x6] sm:$0x3]
      %v372 = vld [vmem:[%s337 + $0x8] sm:$0x3]
      %v373 = vld [vmem:[%s337 + $0xa] sm:$0x3]
      %v374 = vld [vmem:[%s337 + $0xc] sm:$0x3]
      %v375 = vld [vmem:[%s337 + $0xe] sm:$0x3]
      %v376 = vld [vmem:[%s337 + $0x10] sm:$0x3]
      %v377 = vld [vmem:[%s337 + $0x12] sm:$0x3]
      %v378 = vld [vmem:[%s337 + $0x14] sm:$0x3]
      %v379 = vld [vmem:[%s337 + $0x16] sm:$0x3]
      %v380 = vld [vmem:[%s337 + $0x18] sm:$0x3]
      %v381 = vld [vmem:[%s337 + $0x1a] sm:$0x3]
      %v382 = vld [vmem:[%s337 + $0x1c] sm:$0x3]
      %v383 = vld [vmem:[%s337 + $0x1e] sm:$0x3]
      %vm384 = vcmask 1024
      %vm385 = vsmask.f32 1280
      %vm386 = vmand %vm384, %vm385
      %v387 = vld [vmem:[#allocation2] sm:$0x3]
      %v388 = vsel %vm386, %v368, %v387
      %389 = vst [vmem:[#allocation2] sm:$0x3] %v388
      %v390 = vld [vmem:[#allocation2 + $0x2] sm:$0x3]
      %v391 = vsel %vm386, %v369, %v390
      %392 = vst [vmem:[#allocation2 + $0x2] sm:$0x3] %v391
      %v393 = vld [vmem:[#allocation2 + $0x4] sm:$0x3]
      %v394 = vsel %vm386, %v370, %v393
      %395 = vst [vmem:[#allocation2 + $0x4] sm:$0x3] %v394
      %v396 = vld [vmem:[#allocation2 + $0x6] sm:$0x3]
      %v397 = vsel %vm386, %v371, %v396
      %398 = vst [vmem:[#allocation2 + $0x6] sm:$0x3] %v397
      %v399 = vld [vmem:[#allocation2 + $0x8] sm:$0x3]
      %v400 = vsel %vm386, %v372, %v399
      %401 = vst [vmem:[#allocation2 + $0x8] sm:$0x3] %v400
      %v402 = vld [vmem:[#allocation2 + $0xa] sm:$0x3]
      %v403 = vsel %vm386, %v373, %v402
      %404 = vst [vmem:[#allocation2 + $0xa] sm:$0x3] %v403
      %v405 = vld [vmem:[#allocation2 + $0xc] sm:$0x3]
      %v406 = vsel %vm386, %v374, %v405
      %407 = vst [vmem:[#allocation2 + $0xc] sm:$0x3] %v406
      %v408 = vld [vmem:[#allocation2 + $0xe] sm:$0x3]
      %v409 = vsel %vm386, %v375, %v408
      %410 = vst [vmem:[#allocation2 + $0xe] sm:$0x3] %v409
      %v411 = vld [vmem:[#allocation2 + $0x10] sm:$0x3]
      %v412 = vsel %vm386, %v376, %v411
      %413 = vst [vmem:[#allocation2 + $0x10] sm:$0x3] %v412
      %v414 = vld [vmem:[#allocation2 + $0x12] sm:$0x3]
      %v415 = vsel %vm386, %v377, %v414
      %416 = vst [vmem:[#allocation2 + $0x12] sm:$0x3] %v415
      %v417 = vld [vmem:[#allocation2 + $0x14] sm:$0x3]
      %v418 = vsel %vm386, %v378, %v417
      %419 = vst [vmem:[#allocation2 + $0x14] sm:$0x3] %v418
      %v420 = vld [vmem:[#allocation2 + $0x16] sm:$0x3]
      %v421 = vsel %vm386, %v379, %v420
      %422 = vst [vmem:[#allocation2 + $0x16] sm:$0x3] %v421
      %v423 = vld [vmem:[#allocation2 + $0x18] sm:$0x3]
      %v424 = vsel %vm386, %v380, %v423
      %425 = vst [vmem:[#allocation2 + $0x18] sm:$0x3] %v424
      %v426 = vld [vmem:[#allocation2 + $0x1a] sm:$0x3]
      %v427 = vsel %vm386, %v381, %v426
      %428 = vst [vmem:[#allocation2 + $0x1a] sm:$0x3] %v427
      %v429 = vld [vmem:[#allocation2 + $0x1c] sm:$0x3]
      %v430 = vsel %vm386, %v382, %v429
      %431 = vst [vmem:[#allocation2 + $0x1c] sm:$0x3] %v430
      %v432 = vld [vmem:[#allocation2 + $0x1e] sm:$0x3]
      %v433 = vsel %vm386, %v383, %v432
      %434 = vst [vmem:[#allocation2 + $0x1e] sm:$0x3] %v433
      %v435 = vld [vmem:[%s353] sm:$0x3]
      %v436 = vld [vmem:[%s353 + $0x2] sm:$0x3]
      %s437 = scalar_lea.vmem [#allocation2], 32
      %v438 = vld [vmem:[%s437] sm:$0x3]
      %v439 = vsel %vm386, %v435, %v438
      %440 = vst [vmem:[%s437] sm:$0x3] %v439
      %v441 = vld [vmem:[%s437 + $0x2] sm:$0x3]
      %v442 = vsel %vm386, %v436, %v441
      %443 = vst [vmem:[%s437 + $0x2] sm:$0x3] %v442
      %v444 = vld [vmem:[#allocation2] sm:$0x1]
      %v445 = vld [vmem:[#allocation2 + $0x2] sm:$0x1]
      %v446 = vld [vmem:[#allocation2 + $0x4] sm:$0x1]
      %v447 = vld [vmem:[#allocation2 + $0x6] sm:$0x1]
      %v448 = vld [vmem:[#allocation2 + $0x8] sm:$0x1]
      %v449 = vld [vmem:[#allocation2 + $0xa] sm:$0x1]
      %v450 = vld [vmem:[#allocation2 + $0xc] sm:$0x1]
      %v451 = vld [vmem:[#allocation2 + $0xe] sm:$0x1]
      %v452 = vld [vmem:[#allocation2 + $0x10] sm:$0x1]
      %v453 = vld [vmem:[#allocation2 + $0x12] sm:$0x1]
      %v454 = vld [vmem:[#allocation2 + $0x14] sm:$0x1]
      %v455 = vld [vmem:[#allocation2 + $0x16] sm:$0x1]
      %v456 = vld [vmem:[#allocation2 + $0x18] sm:$0x1]
      %v457 = vld [vmem:[#allocation2 + $0x1a] sm:$0x1]
      %v458 = vld [vmem:[#allocation2 + $0x1c] sm:$0x1]
      %v459 = vld [vmem:[#allocation2 + $0x1e] sm:$0x1]
      %v460 = vld [vmem:[%s2] sm:$0x1]
      %s461 = scalar_lea.vmem %s2, 1
      %v462 = vld [vmem:[%s461] sm:$0x1]
      %v480 = vunpack.c.l.s4 1983009808
      %v481 = vunpack.c.0.s8 %v480
      %v482 = vlaneseq
      %v483 = vshrl.u32 %v482, 7
      %v484 = vsub.s32 %v481, %v483
      %v485 = vrot.slane %v444, %v484
      %v487 = vunpack.c.l.s4 1983009808
      %v488 = vunpack.c.0.s8 %v487
      %v489 = vlaneseq
      %v490 = vshrl.u32 %v489, 7
      %v491 = vsub.s32 %v488, %v490
      %v492 = vrot.slane %v445, %v491
      %v494 = vunpack.c.l.s4 1983009808
      %v495 = vunpack.c.0.s8 %v494
      %v496 = vlaneseq
      %v497 = vshrl.u32 %v496, 7
      %v498 = vsub.s32 %v495, %v497
      %v499 = vrot.slane %v446, %v498
      %v501 = vunpack.c.l.s4 1983009808
      %v502 = vunpack.c.0.s8 %v501
      %v503 = vlaneseq
      %v504 = vshrl.u32 %v503, 7
      %v505 = vsub.s32 %v502, %v504
      %v506 = vrot.slane %v447, %v505
      %v508 = vunpack.c.l.s4 1983009808
      %v509 = vunpack.c.0.s8 %v508
      %v510 = vlaneseq
      %v511 = vshrl.u32 %v510, 7
      %v512 = vsub.s32 %v509, %v511
      %v513 = vrot.slane %v448, %v512
      %v515 = vunpack.c.l.s4 1983009808
      %v516 = vunpack.c.0.s8 %v515
      %v517 = vlaneseq
      %v518 = vshrl.u32 %v517, 7
      %v519 = vsub.s32 %v516, %v518
      %v520 = vrot.slane %v449, %v519
      %v522 = vunpack.c.l.s4 1983009808
      %v523 = vunpack.c.0.s8 %v522
      %v524 = vlaneseq
      %v525 = vshrl.u32 %v524, 7
      %v526 = vsub.s32 %v523, %v525
      %v527 = vrot.slane %v450, %v526
      %v529 = vunpack.c.l.s4 1983009808
      %v530 = vunpack.c.0.s8 %v529
      %v531 = vlaneseq
      %v532 = vshrl.u32 %v531, 7
      %v533 = vsub.s32 %v530, %v532
      %v534 = vrot.slane %v451, %v533
      %v536 = vunpack.c.l.s4 1983009808
      %v537 = vunpack.c.0.s8 %v536
      %v538 = vlaneseq
      %v539 = vshrl.u32 %v538, 7
      %v540 = vsub.s32 %v537, %v539
      %v541 = vrot.slane %v452, %v540
      %v543 = vunpack.c.l.s4 1983009808
      %v544 = vunpack.c.0.s8 %v543
      %v545 = vlaneseq
      %v546 = vshrl.u32 %v545, 7
      %v547 = vsub.s32 %v544, %v546
      %v548 = vrot.slane %v453, %v547
      %v550 = vunpack.c.l.s4 1983009808
      %v551 = vunpack.c.0.s8 %v550
      %v552 = vlaneseq
      %v553 = vshrl.u32 %v552, 7
      %v554 = vsub.s32 %v551, %v553
      %v555 = vrot.slane %v454, %v554
      %v557 = vunpack.c.l.s4 1983009808
      %v558 = vunpack.c.0.s8 %v557
      %v559 = vlaneseq
      %v560 = vshrl.u32 %v559, 7
      %v561 = vsub.s32 %v558, %v560
      %v562 = vrot.slane %v455, %v561
      %v564 = vunpack.c.l.s4 1983009808
      %v565 = vunpack.c.0.s8 %v564
      %v566 = vlaneseq
      %v567 = vshrl.u32 %v566, 7
      %v568 = vsub.s32 %v565, %v567
      %v569 = vrot.slane %v456, %v568
      %v571 = vunpack.c.l.s4 1983009808
      %v572 = vunpack.c.0.s8 %v571
      %v573 = vlaneseq
      %v574 = vshrl.u32 %v573, 7
      %v575 = vsub.s32 %v572, %v574
      %v576 = vrot.slane %v457, %v575
      %v578 = vunpack.c.l.s4 1983009808
      %v579 = vunpack.c.0.s8 %v578
      %v580 = vlaneseq
      %v581 = vshrl.u32 %v580, 7
      %v582 = vsub.s32 %v579, %v581
      %v583 = vrot.slane %v458, %v582
      %v585 = vunpack.c.l.s4 1983009808
      %v586 = vunpack.c.0.s8 %v585
      %v587 = vlaneseq
      %v588 = vshrl.u32 %v587, 7
      %v589 = vsub.s32 %v586, %v588
      %v590 = vrot.slane %v459, %v589
      %v591 = vunpack.c.l.b16 %v485
      %v592 = vunpack.c.l.b16 %v492
      %v593 = vunpack.c.l.b16 %v499
      %v594 = vunpack.c.l.b16 %v506
      %v595 = vunpack.c.l.b16 %v513
      %v596 = vunpack.c.l.b16 %v520
      %v597 = vunpack.c.l.b16 %v527
      %v598 = vunpack.c.l.b16 %v534
      %v599 = vunpack.c.l.b16 %v541
      %v600 = vunpack.c.l.b16 %v548
      %v601 = vunpack.c.l.b16 %v555
      %v602 = vunpack.c.l.b16 %v562
      %v603 = vunpack.c.l.b16 %v569
      %v604 = vunpack.c.l.b16 %v576
      %v605 = vunpack.c.l.b16 %v583
      %v606 = vunpack.c.l.b16 %v590
      %v607 = vrot.slane %v591, 1
      %vm608 = vcmask 1041409
      %v609 = vsel %vm608, %v592, %v607
      %v610 = vrot.slane %v593, 7
      %vm611 = vcmask 1042434
      %v612 = vsel %vm611, %v610, %v609
      %v613 = vrot.slane %v594, 6
      %vm614 = vcmask 1043459
      %v615 = vsel %vm614, %v613, %v612
      %v616 = vrot.slane %v595, 5
      %vm617 = vcmask 1044484
      %v618 = vsel %vm617, %v616, %v615
      %v619 = vrot.slane %v596, 4
      %vm620 = vcmask 1045509
      %v621 = vsel %vm620, %v619, %v618
      %v622 = vrot.slane %v597, 3
      %vm623 = vcmask 1046534
      %v624 = vsel %vm623, %v622, %v621
      %v625 = vrot.slane %v598, 2
      %vm626 = vcmask 1047559
      %v627 = vsel %vm626, %v625, %v624
      %v628 = vrot.slane %v599, 1
      %v629 = vsel %vm608, %v600, %v628
      %v630 = vrot.slane %v601, 7
      %v631 = vsel %vm611, %v630, %v629
      %v632 = vrot.slane %v602, 6
      %v633 = vsel %vm614, %v632, %v631
      %v634 = vrot.slane %v603, 5
      %v635 = vsel %vm617, %v634, %v633
      %v636 = vrot.slane %v604, 4
      %v637 = vsel %vm620, %v636, %v635
      %v638 = vrot.slane %v605, 3
      %v639 = vsel %vm623, %v638, %v637
      %v640 = vrot.slane %v606, 2
      %v641 = vsel %vm626, %v640, %v639
      %v642 = vpack.c.b16 %v641, %v627
      %vm643 = vcmask 7168
      %v645 = vsel %vm643, %v642, 0
      %vm647 = vcmask 1040384
      %v648 = vsel 0, 4294967295, 65535
      %v649 = vsel %vm647, %v648, 0
      %v651 = vand.u32 %v462, %v649
      %653 = vmatprep.subr.bf16.mxu0 0
      %654 = vmatpush1.bf16.msra.mxu0 %v651
      %655 = vmatprep.subr.bf16.mxu0 0
      %656 = vmatpush1.bf16.msra.mxu0 0
      %657 = vmatprep.subr.bf16.mxu0 0
      %658 = vmatpush1.bf16.msra.mxu0 0
      %659 = vmatprep.subr.bf16.mxu0 0
      %660 = vmatpush1.bf16.msra.mxu0 0
      %661 = vmatprep.subr.bf16.mxu0 0
      %662 = vmatpush1.bf16.msra.mxu0 0
      %663 = vmatprep.subr.bf16.mxu0 0
      %664 = vmatpush1.bf16.msra.mxu0 0
      %665 = vmatprep.subr.bf16.mxu0 0
      %666 = vmatpush1.bf16.msra.mxu0 0
      %667 = vmatprep.subr.bf16.mxu0 0
      %668 = vmatpush1.bf16.msra.mxu0 0
      %669 = vmatprep.subr.bf16.mxu0 0
      %670 = vmatpush1.bf16.msra.mxu0 0
      %671 = vmatprep.subr.bf16.mxu0 0
      %672 = vmatpush1.bf16.msra.mxu0 0
      %673 = vmatprep.subr.bf16.mxu0 0
      %674 = vmatpush1.bf16.msra.mxu0 0
      %675 = vmatprep.subr.bf16.mxu0 0
      %676 = vmatpush1.bf16.msra.mxu0 0
      %677 = vmatprep.subr.bf16.mxu0 0
      %678 = vmatpush1.bf16.msra.mxu0 0
      %679 = vmatprep.subr.bf16.mxu0 0
      %680 = vmatpush1.bf16.msra.mxu0 0
      %681 = vmatprep.subr.bf16.mxu0 0
      %682 = vmatpush1.bf16.msra.mxu0 0
      %683 = vmatprep.subr.bf16.mxu0 0
      %684 = vmatpush1.bf16.msra.mxu0 0
      %685 = vmatprep.mubr.bf16.mxu0 0
      %686 = vmatmul.mubr.bf16.gmra.mrb[0].mxu0 %v645
      %v687 = vpop.f32.mrb[0].mxu0
      %v688 = vadd.f32 0.0, %v687
      %v689 = vpop.f32.mrb[0].mxu0
      %v690 = vpop.f32.mrb[0].mxu0
      %v691 = vadd.f32 0.0, %v690
      %v692 = vpop.f32.mrb[0].mxu0
      %693 = vdwg.mxu0
      %v694 = vrot.slane %v592, 7
      %v695 = vsel %vm608, %v694, %v591
      %v696 = vrot.slane %v593, 6
      %v697 = vsel %vm611, %v696, %v695
      %v698 = vrot.slane %v594, 5
      %v699 = vsel %vm614, %v698, %v697
      %v700 = vrot.slane %v595, 4
      %v701 = vsel %vm617, %v700, %v699
      %v702 = vrot.slane %v596, 3
      %v703 = vsel %vm620, %v702, %v701
      %v704 = vrot.slane %v597, 2
      %v705 = vsel %vm623, %v704, %v703
      %v706 = vrot.slane %v598, 1
      %v707 = vsel %vm626, %v706, %v705
      %v708 = vrot.slane %v600, 7
      %v709 = vsel %vm608, %v708, %v599
      %v710 = vrot.slane %v601, 6
      %v711 = vsel %vm611, %v710, %v709
      %v712 = vrot.slane %v602, 5
      %v713 = vsel %vm614, %v712, %v711
      %v714 = vrot.slane %v603, 4
      %v715 = vsel %vm617, %v714, %v713
      %v716 = vrot.slane %v604, 3
      %v717 = vsel %vm620, %v716, %v715
      %v718 = vrot.slane %v605, 2
      %v719 = vsel %vm623, %v718, %v717
      %v720 = vrot.slane %v606, 1
      %v721 = vsel %vm626, %v720, %v719
      %v722 = vpack.c.b16 %v721, %v707
      %v724 = vsel %vm643, %v722, 0
      %v727 = vand.u32 %v460, %v649
      %729 = vmatprep.subr.bf16.mxu0 0
      %730 = vmatpush1.bf16.msra.mxu0 %v727
      %731 = vmatprep.subr.bf16.mxu0 0
      %732 = vmatpush1.bf16.msra.mxu0 0
      %733 = vmatprep.subr.bf16.mxu0 0
      %734 = vmatpush1.bf16.msra.mxu0 0
      %735 = vmatprep.subr.bf16.mxu0 0
      %736 = vmatpush1.bf16.msra.mxu0 0
      %737 = vmatprep.subr.bf16.mxu0 0
      %738 = vmatpush1.bf16.msra.mxu0 0
      %739 = vmatprep.subr.bf16.mxu0 0
      %740 = vmatpush1.bf16.msra.mxu0 0
      %741 = vmatprep.subr.bf16.mxu0 0
      %742 = vmatpush1.bf16.msra.mxu0 0
      %743 = vmatprep.subr.bf16.mxu0 0
      %744 = vmatpush1.bf16.msra.mxu0 0
      %745 = vmatprep.subr.bf16.mxu0 0
      %746 = vmatpush1.bf16.msra.mxu0 0
      %747 = vmatprep.subr.bf16.mxu0 0
      %748 = vmatpush1.bf16.msra.mxu0 0
      %749 = vmatprep.subr.bf16.mxu0 0
      %750 = vmatpush1.bf16.msra.mxu0 0
      %751 = vmatprep.subr.bf16.mxu0 0
      %752 = vmatpush1.bf16.msra.mxu0 0
      %753 = vmatprep.subr.bf16.mxu0 0
      %754 = vmatpush1.bf16.msra.mxu0 0
      %755 = vmatprep.subr.bf16.mxu0 0
      %756 = vmatpush1.bf16.msra.mxu0 0
      %757 = vmatprep.subr.bf16.mxu0 0
      %758 = vmatpush1.bf16.msra.mxu0 0
      %759 = vmatprep.subr.bf16.mxu0 0
      %760 = vmatpush1.bf16.msra.mxu0 0
      %761 = vmatprep.mubr.bf16.mxu0 0
      %762 = vmatmul.mubr.bf16.gmra.mrb[0].mxu0 %v724
      %v763 = vpop.f32.mrb[0].mxu0
      %v764 = vadd.f32 %v688, %v763
      %v765 = vpop.f32.mrb[0].mxu0
      %v766 = vpop.f32.mrb[0].mxu0
      %v767 = vadd.f32 %v691, %v766
      %v768 = vpop.f32.mrb[0].mxu0
      %769 = vdwg.mxu0
      %v770 = vld [vmem:[#allocation2] sm:$0x2]
      %v771 = vld [vmem:[#allocation2 + $0x2] sm:$0x2]
      %v772 = vld [vmem:[#allocation2 + $0x4] sm:$0x2]
      %v773 = vld [vmem:[#allocation2 + $0x6] sm:$0x2]
      %v774 = vld [vmem:[#allocation2 + $0x8] sm:$0x2]
      %v775 = vld [vmem:[#allocation2 + $0xa] sm:$0x2]
      %v776 = vld [vmem:[#allocation2 + $0xc] sm:$0x2]
      %v777 = vld [vmem:[#allocation2 + $0xe] sm:$0x2]
      %v778 = vld [vmem:[#allocation2 + $0x10] sm:$0x2]
      %v779 = vld [vmem:[#allocation2 + $0x12] sm:$0x2]
      %v780 = vld [vmem:[#allocation2 + $0x14] sm:$0x2]
      %v781 = vld [vmem:[#allocation2 + $0x16] sm:$0x2]
      %v782 = vld [vmem:[#allocation2 + $0x18] sm:$0x2]
      %v783 = vld [vmem:[#allocation2 + $0x1a] sm:$0x2]
      %v784 = vld [vmem:[#allocation2 + $0x1c] sm:$0x2]
      %v785 = vld [vmem:[#allocation2 + $0x1e] sm:$0x2]
      %s786 = scalar_lea.vmem %s2, 2
      %v787 = vld [vmem:[%s786] sm:$0x1]
      %v805 = vunpack.c.l.s4 1983009808
      %v806 = vunpack.c.0.s8 %v805
      %v807 = vlaneseq
      %v808 = vshrl.u32 %v807, 7
      %v809 = vsub.s32 %v806, %v808
      %v810 = vrot.slane %v770, %v809
      %v812 = vunpack.c.l.s4 1983009808
      %v813 = vunpack.c.0.s8 %v812
      %v814 = vlaneseq
      %v815 = vshrl.u32 %v814, 7
      %v816 = vsub.s32 %v813, %v815
      %v817 = vrot.slane %v771, %v816
      %v819 = vunpack.c.l.s4 1983009808
      %v820 = vunpack.c.0.s8 %v819
      %v821 = vlaneseq
      %v822 = vshrl.u32 %v821, 7
      %v823 = vsub.s32 %v820, %v822
      %v824 = vrot.slane %v772, %v823
      %v826 = vunpack.c.l.s4 1983009808
      %v827 = vunpack.c.0.s8 %v826
      %v828 = vlaneseq
      %v829 = vshrl.u32 %v828, 7
      %v830 = vsub.s32 %v827, %v829
      %v831 = vrot.slane %v773, %v830
      %v833 = vunpack.c.l.s4 1983009808
      %v834 = vunpack.c.0.s8 %v833
      %v835 = vlaneseq
      %v836 = vshrl.u32 %v835, 7
      %v837 = vsub.s32 %v834, %v836
      %v838 = vrot.slane %v774, %v837
      %v840 = vunpack.c.l.s4 1983009808
      %v841 = vunpack.c.0.s8 %v840
      %v842 = vlaneseq
      %v843 = vshrl.u32 %v842, 7
      %v844 = vsub.s32 %v841, %v843
      %v845 = vrot.slane %v775, %v844
      %v847 = vunpack.c.l.s4 1983009808
      %v848 = vunpack.c.0.s8 %v847
      %v849 = vlaneseq
      %v850 = vshrl.u32 %v849, 7
      %v851 = vsub.s32 %v848, %v850
      %v852 = vrot.slane %v776, %v851
      %v854 = vunpack.c.l.s4 1983009808
      %v855 = vunpack.c.0.s8 %v854
      %v856 = vlaneseq
      %v857 = vshrl.u32 %v856, 7
      %v858 = vsub.s32 %v855, %v857
      %v859 = vrot.slane %v777, %v858
      %v861 = vunpack.c.l.s4 1983009808
      %v862 = vunpack.c.0.s8 %v861
      %v863 = vlaneseq
      %v864 = vshrl.u32 %v863, 7
      %v865 = vsub.s32 %v862, %v864
      %v866 = vrot.slane %v778, %v865
      %v868 = vunpack.c.l.s4 1983009808
      %v869 = vunpack.c.0.s8 %v868
      %v870 = vlaneseq
      %v871 = vshrl.u32 %v870, 7
      %v872 = vsub.s32 %v869, %v871
      %v873 = vrot.slane %v779, %v872
      %v875 = vunpack.c.l.s4 1983009808
      %v876 = vunpack.c.0.s8 %v875
      %v877 = vlaneseq
      %v878 = vshrl.u32 %v877, 7
      %v879 = vsub.s32 %v876, %v878
      %v880 = vrot.slane %v780, %v879
      %v882 = vunpack.c.l.s4 1983009808
      %v883 = vunpack.c.0.s8 %v882
      %v884 = vlaneseq
      %v885 = vshrl.u32 %v884, 7
      %v886 = vsub.s32 %v883, %v885
      %v887 = vrot.slane %v781, %v886
      %v889 = vunpack.c.l.s4 1983009808
      %v890 = vunpack.c.0.s8 %v889
      %v891 = vlaneseq
      %v892 = vshrl.u32 %v891, 7
      %v893 = vsub.s32 %v890, %v892
      %v894 = vrot.slane %v782, %v893
      %v896 = vunpack.c.l.s4 1983009808
      %v897 = vunpack.c.0.s8 %v896
      %v898 = vlaneseq
      %v899 = vshrl.u32 %v898, 7
      %v900 = vsub.s32 %v897, %v899
      %v901 = vrot.slane %v783, %v900
      %v903 = vunpack.c.l.s4 1983009808
      %v904 = vunpack.c.0.s8 %v903
      %v905 = vlaneseq
      %v906 = vshrl.u32 %v905, 7
      %v907 = vsub.s32 %v904, %v906
      %v908 = vrot.slane %v784, %v907
      %v910 = vunpack.c.l.s4 1983009808
      %v911 = vunpack.c.0.s8 %v910
      %v912 = vlaneseq
      %v913 = vshrl.u32 %v912, 7
      %v914 = vsub.s32 %v911, %v913
      %v915 = vrot.slane %v785, %v914
      %v916 = vunpack.c.l.b16 %v810
      %v917 = vunpack.c.l.b16 %v817
      %v918 = vunpack.c.l.b16 %v824
      %v919 = vunpack.c.l.b16 %v831
      %v920 = vunpack.c.l.b16 %v838
      %v921 = vunpack.c.l.b16 %v845
      %v922 = vunpack.c.l.b16 %v852
      %v923 = vunpack.c.l.b16 %v859
      %v924 = vunpack.c.l.b16 %v866
      %v925 = vunpack.c.l.b16 %v873
      %v926 = vunpack.c.l.b16 %v880
      %v927 = vunpack.c.l.b16 %v887
      %v928 = vunpack.c.l.b16 %v894
      %v929 = vunpack.c.l.b16 %v901
      %v930 = vunpack.c.l.b16 %v908
      %v931 = vunpack.c.l.b16 %v915
      %v932 = vrot.slane %v916, 2
      %v933 = vrot.slane %v917, 1
      %v934 = vsel %vm608, %v933, %v932
      %v935 = vsel %vm611, %v918, %v934
      %v936 = vrot.slane %v919, 7
      %v937 = vsel %vm614, %v936, %v935
      %v938 = vrot.slane %v920, 6
      %v939 = vsel %vm617, %v938, %v937
      %v940 = vrot.slane %v921, 5
      %v941 = vsel %vm620, %v940, %v939
      %v942 = vrot.slane %v922, 4
      %v943 = vsel %vm623, %v942, %v941
      %v944 = vrot.slane %v923, 3
      %v945 = vsel %vm626, %v944, %v943
      %v946 = vrot.slane %v924, 2
      %v947 = vrot.slane %v925, 1
      %v948 = vsel %vm608, %v947, %v946
      %v949 = vsel %vm611, %v926, %v948
      %v950 = vrot.slane %v927, 7
      %v951 = vsel %vm614, %v950, %v949
      %v952 = vrot.slane %v928, 6
      %v953 = vsel %vm617, %v952, %v951
      %v954 = vrot.slane %v929, 5
      %v955 = vsel %vm620, %v954, %v953
      %v956 = vrot.slane %v930, 4
      %v957 = vsel %vm623, %v956, %v955
      %v958 = vrot.slane %v931, 3
      %v959 = vsel %vm626, %v958, %v957
      %v960 = vpack.c.b16 %v959, %v945
      %v962 = vsel %vm643, %v960, 0
      %v965 = vand.u32 %v787, %v649
      %967 = vmatprep.subr.bf16.mxu0 0
      %968 = vmatpush1.bf16.msra.mxu0 %v965
      %969 = vmatprep.subr.bf16.mxu0 0
      %970 = vmatpush1.bf16.msra.mxu0 0
      %971 = vmatprep.subr.bf16.mxu0 0
      %972 = vmatpush1.bf16.msra.mxu0 0
      %973 = vmatprep.subr.bf16.mxu0 0
      %974 = vmatpush1.bf16.msra.mxu0 0
      %975 = vmatprep.subr.bf16.mxu0 0
      %976 = vmatpush1.bf16.msra.mxu0 0
      %977 = vmatprep.subr.bf16.mxu0 0
      %978 = vmatpush1.bf16.msra.mxu0 0
      %979 = vmatprep.subr.bf16.mxu0 0
      %980 = vmatpush1.bf16.msra.mxu0 0
      %981 = vmatprep.subr.bf16.mxu0 0
      %982 = vmatpush1.bf16.msra.mxu0 0
      %983 = vmatprep.subr.bf16.mxu0 0
      %984 = vmatpush1.bf16.msra.mxu0 0
      %985 = vmatprep.subr.bf16.mxu0 0
      %986 = vmatpush1.bf16.msra.mxu0 0
      %987 = vmatprep.subr.bf16.mxu0 0
      %988 = vmatpush1.bf16.msra.mxu0 0
      %989 = vmatprep.subr.bf16.mxu0 0
      %990 = vmatpush1.bf16.msra.mxu0 0
      %991 = vmatprep.subr.bf16.mxu0 0
      %992 = vmatpush1.bf16.msra.mxu0 0
      %993 = vmatprep.subr.bf16.mxu0 0
      %994 = vmatpush1.bf16.msra.mxu0 0
      %995 = vmatprep.subr.bf16.mxu0 0
      %996 = vmatpush1.bf16.msra.mxu0 0
      %997 = vmatprep.subr.bf16.mxu0 0
      %998 = vmatpush1.bf16.msra.mxu0 0
      %999 = vmatprep.mubr.bf16.mxu0 0
      %1000 = vmatmul.mubr.bf16.gmra.mrb[0].mxu0 %v962
      %v1001 = vpop.f32.mrb[0].mxu0
      %v1002 = vadd.f32 0.0, %v1001
      %v1003 = vpop.f32.mrb[0].mxu0
      %v1004 = vpop.f32.mrb[0].mxu0
      %v1005 = vadd.f32 0.0, %v1004
      %v1006 = vpop.f32.mrb[0].mxu0
      %1007 = vdwg.mxu0
      %v1008 = vadd.f32 %v764, %v1002
      %v1009 = vadd.f32 %v767, %v1005
      %s1010 = scalar_lea.vmem [#allocation2], 2
      %v1011 = vld [vmem:[%s1010] sm:$0x1]
      %v1012 = vld [vmem:[%s1010 + $0x2] sm:$0x1]
      %v1013 = vld [vmem:[%s1010 + $0x4] sm:$0x1]
      %v1014 = vld [vmem:[%s1010 + $0x6] sm:$0x1]
      %v1015 = vld [vmem:[%s1010 + $0x8] sm:$0x1]
      %v1016 = vld [vmem:[%s1010 + $0xa] sm:$0x1]
      %v1017 = vld [vmem:[%s1010 + $0xc] sm:$0x1]
      %v1018 = vld [vmem:[%s1010 + $0xe] sm:$0x1]
      %v1019 = vld [vmem:[%s1010 + $0x10] sm:$0x1]
      %v1020 = vld [vmem:[%s1010 + $0x12] sm:$0x1]
      %v1021 = vld [vmem:[%s1010 + $0x14] sm:$0x1]
      %v1022 = vld [vmem:[%s1010 + $0x16] sm:$0x1]
      %v1023 = vld [vmem:[%s1010 + $0x18] sm:$0x1]
      %v1024 = vld [vmem:[%s1010 + $0x1a] sm:$0x1]
      %v1025 = vld [vmem:[%s1010 + $0x1c] sm:$0x1]
      %v1026 = vld [vmem:[%s1010 + $0x1e] sm:$0x1]
      %s1027 = scalar_lea.vmem %s2, 3
      %v1028 = vld [vmem:[%s1027] sm:$0x1]
      %v1046 = vunpack.c.l.s4 1983009808
      %v1047 = vunpack.c.0.s8 %v1046
      %v1048 = vlaneseq
      %v1049 = vshrl.u32 %v1048, 7
      %v1050 = vsub.s32 %v1047, %v1049
      %v1051 = vrot.slane %v1011, %v1050
      %v1053 = vunpack.c.l.s4 1983009808
      %v1054 = vunpack.c.0.s8 %v1053
      %v1055 = vlaneseq
      %v1056 = vshrl.u32 %v1055, 7
      %v1057 = vsub.s32 %v1054, %v1056
      %v1058 = vrot.slane %v1012, %v1057
      %v1060 = vunpack.c.l.s4 1983009808
      %v1061 = vunpack.c.0.s8 %v1060
      %v1062 = vlaneseq
      %v1063 = vshrl.u32 %v1062, 7
      %v1064 = vsub.s32 %v1061, %v1063
      %v1065 = vrot.slane %v1013, %v1064
      %v1067 = vunpack.c.l.s4 1983009808
      %v1068 = vunpack.c.0.s8 %v1067
      %v1069 = vlaneseq
      %v1070 = vshrl.u32 %v1069, 7
      %v1071 = vsub.s32 %v1068, %v1070
      %v1072 = vrot.slane %v1014, %v1071
      %v1074 = vunpack.c.l.s4 1983009808
      %v1075 = vunpack.c.0.s8 %v1074
      %v1076 = vlaneseq
      %v1077 = vshrl.u32 %v1076, 7
      %v1078 = vsub.s32 %v1075, %v1077
      %v1079 = vrot.slane %v1015, %v1078
      %v1081 = vunpack.c.l.s4 1983009808
      %v1082 = vunpack.c.0.s8 %v1081
      %v1083 = vlaneseq
      %v1084 = vshrl.u32 %v1083, 7
      %v1085 = vsub.s32 %v1082, %v1084
      %v1086 = vrot.slane %v1016, %v1085
      %v1088 = vunpack.c.l.s4 1983009808
      %v1089 = vunpack.c.0.s8 %v1088
      %v1090 = vlaneseq
      %v1091 = vshrl.u32 %v1090, 7
      %v1092 = vsub.s32 %v1089, %v1091
      %v1093 = vrot.slane %v1017, %v1092
      %v1095 = vunpack.c.l.s4 1983009808
      %v1096 = vunpack.c.0.s8 %v1095
      %v1097 = vlaneseq
      %v1098 = vshrl.u32 %v1097, 7
      %v1099 = vsub.s32 %v1096, %v1098
      %v1100 = vrot.slane %v1018, %v1099
      %v1102 = vunpack.c.l.s4 1983009808
      %v1103 = vunpack.c.0.s8 %v1102
      %v1104 = vlaneseq
      %v1105 = vshrl.u32 %v1104, 7
      %v1106 = vsub.s32 %v1103, %v1105
      %v1107 = vrot.slane %v1019, %v1106
      %v1109 = vunpack.c.l.s4 1983009808
      %v1110 = vunpack.c.0.s8 %v1109
      %v1111 = vlaneseq
      %v1112 = vshrl.u32 %v1111, 7
      %v1113 = vsub.s32 %v1110, %v1112
      %v1114 = vrot.slane %v1020, %v1113
      %v1116 = vunpack.c.l.s4 1983009808
      %v1117 = vunpack.c.0.s8 %v1116
      %v1118 = vlaneseq
      %v1119 = vshrl.u32 %v1118, 7
      %v1120 = vsub.s32 %v1117, %v1119
      %v1121 = vrot.slane %v1021, %v1120
      %v1123 = vunpack.c.l.s4 1983009808
      %v1124 = vunpack.c.0.s8 %v1123
      %v1125 = vlaneseq
      %v1126 = vshrl.u32 %v1125, 7
      %v1127 = vsub.s32 %v1124, %v1126
      %v1128 = vrot.slane %v1022, %v1127
      %v1130 = vunpack.c.l.s4 1983009808
      %v1131 = vunpack.c.0.s8 %v1130
      %v1132 = vlaneseq
      %v1133 = vshrl.u32 %v1132, 7
      %v1134 = vsub.s32 %v1131, %v1133
      %v1135 = vrot.slane %v1023, %v1134
      %v1137 = vunpack.c.l.s4 1983009808
      %v1138 = vunpack.c.0.s8 %v1137
      %v1139 = vlaneseq
      %v1140 = vshrl.u32 %v1139, 7
      %v1141 = vsub.s32 %v1138, %v1140
      %v1142 = vrot.slane %v1024, %v1141
      %v1144 = vunpack.c.l.s4 1983009808
      %v1145 = vunpack.c.0.s8 %v1144
      %v1146 = vlaneseq
      %v1147 = vshrl.u32 %v1146, 7
      %v1148 = vsub.s32 %v1145, %v1147
      %v1149 = vrot.slane %v1025, %v1148
      %v1151 = vunpack.c.l.s4 1983009808
      %v1152 = vunpack.c.0.s8 %v1151
      %v1153 = vlaneseq
      %v1154 = vshrl.u32 %v1153, 7
      %v1155 = vsub.s32 %v1152, %v1154
      %v1156 = vrot.slane %v1026, %v1155
      %v1157 = vunpack.c.l.b16 %v1051
      %v1158 = vunpack.c.l.b16 %v1058
      %v1159 = vunpack.c.l.b16 %v1065
      %v1160 = vunpack.c.l.b16 %v1072
      %v1161 = vunpack.c.l.b16 %v1079
      %v1162 = vunpack.c.l.b16 %v1086
      %v1163 = vunpack.c.l.b16 %v1093
      %v1164 = vunpack.c.l.b16 %v1100
      %v1165 = vunpack.c.l.b16 %v1107
      %v1166 = vunpack.c.l.b16 %v1114
      %v1167 = vunpack.c.l.b16 %v1121
      %v1168 = vunpack.c.l.b16 %v1128
      %v1169 = vunpack.c.l.b16 %v1135
      %v1170 = vunpack.c.l.b16 %v1142
      %v1171 = vunpack.c.l.b16 %v1149
      %v1172 = vunpack.c.l.b16 %v1156
      %v1173 = vrot.slane %v1158, 7
      %v1174 = vsel %vm608, %v1173, %v1157
      %v1175 = vrot.slane %v1159, 6
      %v1176 = vsel %vm611, %v1175, %v1174
      %v1177 = vrot.slane %v1160, 5
      %v1178 = vsel %vm614, %v1177, %v1176
      %v1179 = vrot.slane %v1161, 4
      %v1180 = vsel %vm617, %v1179, %v1178
      %v1181 = vrot.slane %v1162, 3
      %v1182 = vsel %vm620, %v1181, %v1180
      %v1183 = vrot.slane %v1163, 2
      %v1184 = vsel %vm623, %v1183, %v1182
      %v1185 = vrot.slane %v1164, 1
      %v1186 = vsel %vm626, %v1185, %v1184
      %v1187 = vrot.slane %v1166, 7
      %v1188 = vsel %vm608, %v1187, %v1165
      %v1189 = vrot.slane %v1167, 6
      %v1190 = vsel %vm611, %v1189, %v1188
      %v1191 = vrot.slane %v1168, 5
      %v1192 = vsel %vm614, %v1191, %v1190
      %v1193 = vrot.slane %v1169, 4
      %v1194 = vsel %vm617, %v1193, %v1192
      %v1195 = vrot.slane %v1170, 3
      %v1196 = vsel %vm620, %v1195, %v1194
      %v1197 = vrot.slane %v1171, 2
      %v1198 = vsel %vm623, %v1197, %v1196
      %v1199 = vrot.slane %v1172, 1
      %v1200 = vsel %vm626, %v1199, %v1198
      %v1201 = vpack.c.b16 %v1200, %v1186
      %v1203 = vsel %vm643, %v1201, 0
      %v1206 = vand.u32 %v1028, %v649
      %1208 = vmatprep.subr.bf16.mxu0 0
      %1209 = vmatpush1.bf16.msra.mxu0 %v1206
      %1210 = vmatprep.subr.bf16.mxu0 0
      %1211 = vmatpush1.bf16.msra.mxu0 0
      %1212 = vmatprep.subr.bf16.mxu0 0
      %1213 = vmatpush1.bf16.msra.mxu0 0
      %1214 = vmatprep.subr.bf16.mxu0 0
      %1215 = vmatpush1.bf16.msra.mxu0 0
      %1216 = vmatprep.subr.bf16.mxu0 0
      %1217 = vmatpush1.bf16.msra.mxu0 0
      %1218 = vmatprep.subr.bf16.mxu0 0
      %1219 = vmatpush1.bf16.msra.mxu0 0
      %1220 = vmatprep.subr.bf16.mxu0 0
      %1221 = vmatpush1.bf16.msra.mxu0 0
      %1222 = vmatprep.subr.bf16.mxu0 0
      %1223 = vmatpush1.bf16.msra.mxu0 0
      %1224 = vmatprep.subr.bf16.mxu0 0
      %1225 = vmatpush1.bf16.msra.mxu0 0
      %1226 = vmatprep.subr.bf16.mxu0 0
      %1227 = vmatpush1.bf16.msra.mxu0 0
      %1228 = vmatprep.subr.bf16.mxu0 0
      %1229 = vmatpush1.bf16.msra.mxu0 0
      %1230 = vmatprep.subr.bf16.mxu0 0
      %1231 = vmatpush1.bf16.msra.mxu0 0
      %1232 = vmatprep.subr.bf16.mxu0 0
      %1233 = vmatpush1.bf16.msra.mxu0 0
      %1234 = vmatprep.subr.bf16.mxu0 0
      %1235 = vmatpush1.bf16.msra.mxu0 0
      %1236 = vmatprep.subr.bf16.mxu0 0
      %1237 = vmatpush1.bf16.msra.mxu0 0
      %1238 = vmatprep.subr.bf16.mxu0 0
      %1239 = vmatpush1.bf16.msra.mxu0 0
      %1240 = vmatprep.mubr.bf16.mxu0 0
      %1241 = vmatmul.mubr.bf16.gmra.mrb[0].mxu0 %v1203
      %v1242 = vpop.f32.mrb[0].mxu0
      %v1243 = vadd.f32 0.0, %v1242
      %v1244 = vpop.f32.mrb[0].mxu0
      %v1245 = vpop.f32.mrb[0].mxu0
      %v1246 = vadd.f32 0.0, %v1245
      %v1247 = vpop.f32.mrb[0].mxu0
      %1248 = vdwg.mxu0
      %v1249 = vadd.f32 %v1008, %v1243
      %v1250 = vadd.f32 %v1009, %v1246
      %v1251 = vld [vmem:[%s1010] sm:$0x1]
      %v1252 = vld [vmem:[%s1010 + $0x2] sm:$0x1]
      %v1253 = vld [vmem:[%s1010 + $0x4] sm:$0x1]
      %v1254 = vld [vmem:[%s1010 + $0x6] sm:$0x1]
      %v1255 = vld [vmem:[%s1010 + $0x8] sm:$0x1]
      %v1256 = vld [vmem:[%s1010 + $0xa] sm:$0x1]
      %v1257 = vld [vmem:[%s1010 + $0xc] sm:$0x1]
      %v1258 = vld [vmem:[%s1010 + $0xe] sm:$0x1]
      %v1259 = vld [vmem:[%s1010 + $0x10] sm:$0x1]
      %v1260 = vld [vmem:[%s1010 + $0x12] sm:$0x1]
      %v1261 = vld [vmem:[%s1010 + $0x14] sm:$0x1]
      %v1262 = vld [vmem:[%s1010 + $0x16] sm:$0x1]
      %v1263 = vld [vmem:[%s1010 + $0x18] sm:$0x1]
      %v1264 = vld [vmem:[%s1010 + $0x1a] sm:$0x1]
      %v1265 = vld [vmem:[%s1010 + $0x1c] sm:$0x1]
      %v1266 = vld [vmem:[%s1010 + $0x1e] sm:$0x1]
      %s1267 = scalar_lea.vmem %s2, 4
      %v1268 = vld [vmem:[%s1267] sm:$0x1]
      %v1286 = vunpack.c.l.s4 1983009808
      %v1287 = vunpack.c.0.s8 %v1286
      %v1288 = vlaneseq
      %v1289 = vshrl.u32 %v1288, 7
      %v1290 = vsub.s32 %v1287, %v1289
      %v1291 = vrot.slane %v1251, %v1290
      %v1293 = vunpack.c.l.s4 1983009808
      %v1294 = vunpack.c.0.s8 %v1293
      %v1295 = vlaneseq
      %v1296 = vshrl.u32 %v1295, 7
      %v1297 = vsub.s32 %v1294, %v1296
      %v1298 = vrot.slane %v1252, %v1297
      %v1300 = vunpack.c.l.s4 1983009808
      %v1301 = vunpack.c.0.s8 %v1300
      %v1302 = vlaneseq
      %v1303 = vshrl.u32 %v1302, 7
      %v1304 = vsub.s32 %v1301, %v1303
      %v1305 = vrot.slane %v1253, %v1304
      %v1307 = vunpack.c.l.s4 1983009808
      %v1308 = vunpack.c.0.s8 %v1307
      %v1309 = vlaneseq
      %v1310 = vshrl.u32 %v1309, 7
      %v1311 = vsub.s32 %v1308, %v1310
      %v1312 = vrot.slane %v1254, %v1311
      %v1314 = vunpack.c.l.s4 1983009808
      %v1315 = vunpack.c.0.s8 %v1314
      %v1316 = vlaneseq
      %v1317 = vshrl.u32 %v1316, 7
      %v1318 = vsub.s32 %v1315, %v1317
      %v1319 = vrot.slane %v1255, %v1318
      %v1321 = vunpack.c.l.s4 1983009808
      %v1322 = vunpack.c.0.s8 %v1321
      %v1323 = vlaneseq
      %v1324 = vshrl.u32 %v1323, 7
      %v1325 = vsub.s32 %v1322, %v1324
      %v1326 = vrot.slane %v1256, %v1325
      %v1328 = vunpack.c.l.s4 1983009808
      %v1329 = vunpack.c.0.s8 %v1328
      %v1330 = vlaneseq
      %v1331 = vshrl.u32 %v1330, 7
      %v1332 = vsub.s32 %v1329, %v1331
      %v1333 = vrot.slane %v1257, %v1332
      %v1335 = vunpack.c.l.s4 1983009808
      %v1336 = vunpack.c.0.s8 %v1335
      %v1337 = vlaneseq
      %v1338 = vshrl.u32 %v1337, 7
      %v1339 = vsub.s32 %v1336, %v1338
      %v1340 = vrot.slane %v1258, %v1339
      %v1342 = vunpack.c.l.s4 1983009808
      %v1343 = vunpack.c.0.s8 %v1342
      %v1344 = vlaneseq
      %v1345 = vshrl.u32 %v1344, 7
      %v1346 = vsub.s32 %v1343, %v1345
      %v1347 = vrot.slane %v1259, %v1346
      %v1349 = vunpack.c.l.s4 1983009808
      %v1350 = vunpack.c.0.s8 %v1349
      %v1351 = vlaneseq
      %v1352 = vshrl.u32 %v1351, 7
      %v1353 = vsub.s32 %v1350, %v1352
      %v1354 = vrot.slane %v1260, %v1353
      %v1356 = vunpack.c.l.s4 1983009808
      %v1357 = vunpack.c.0.s8 %v1356
      %v1358 = vlaneseq
      %v1359 = vshrl.u32 %v1358, 7
      %v1360 = vsub.s32 %v1357, %v1359
      %v1361 = vrot.slane %v1261, %v1360
      %v1363 = vunpack.c.l.s4 1983009808
      %v1364 = vunpack.c.0.s8 %v1363
      %v1365 = vlaneseq
      %v1366 = vshrl.u32 %v1365, 7
      %v1367 = vsub.s32 %v1364, %v1366
      %v1368 = vrot.slane %v1262, %v1367
      %v1370 = vunpack.c.l.s4 1983009808
      %v1371 = vunpack.c.0.s8 %v1370
      %v1372 = vlaneseq
      %v1373 = vshrl.u32 %v1372, 7
      %v1374 = vsub.s32 %v1371, %v1373
      %v1375 = vrot.slane %v1263, %v1374
      %v1377 = vunpack.c.l.s4 1983009808
      %v1378 = vunpack.c.0.s8 %v1377
      %v1379 = vlaneseq
      %v1380 = vshrl.u32 %v1379, 7
      %v1381 = vsub.s32 %v1378, %v1380
      %v1382 = vrot.slane %v1264, %v1381
      %v1384 = vunpack.c.l.s4 1983009808
      %v1385 = vunpack.c.0.s8 %v1384
      %v1386 = vlaneseq
      %v1387 = vshrl.u32 %v1386, 7
      %v1388 = vsub.s32 %v1385, %v1387
      %v1389 = vrot.slane %v1265, %v1388
      %v1391 = vunpack.c.l.s4 1983009808
      %v1392 = vunpack.c.0.s8 %v1391
      %v1393 = vlaneseq
      %v1394 = vshrl.u32 %v1393, 7
      %v1395 = vsub.s32 %v1392, %v1394
      %v1396 = vrot.slane %v1266, %v1395
      %v1397 = vunpack.c.l.b16 %v1291
      %v1398 = vunpack.c.l.b16 %v1298
      %v1399 = vunpack.c.l.b16 %v1305
      %v1400 = vunpack.c.l.b16 %v1312
      %v1401 = vunpack.c.l.b16 %v1319
      %v1402 = vunpack.c.l.b16 %v1326
      %v1403 = vunpack.c.l.b16 %v1333
      %v1404 = vunpack.c.l.b16 %v1340
      %v1405 = vunpack.c.l.b16 %v1347
      %v1406 = vunpack.c.l.b16 %v1354
      %v1407 = vunpack.c.l.b16 %v1361
      %v1408 = vunpack.c.l.b16 %v1368
      %v1409 = vunpack.c.l.b16 %v1375
      %v1410 = vunpack.c.l.b16 %v1382
      %v1411 = vunpack.c.l.b16 %v1389
      %v1412 = vunpack.c.l.b16 %v1396
      %v1413 = vrot.slane %v1397, 1
      %v1414 = vsel %vm608, %v1398, %v1413
      %v1415 = vrot.slane %v1399, 7
      %v1416 = vsel %vm611, %v1415, %v1414
      %v1417 = vrot.slane %v1400, 6
      %v1418 = vsel %vm614, %v1417, %v1416
      %v1419 = vrot.slane %v1401, 5
      %v1420 = vsel %vm617, %v1419, %v1418
      %v1421 = vrot.slane %v1402, 4
      %v1422 = vsel %vm620, %v1421, %v1420
      %v1423 = vrot.slane %v1403, 3
      %v1424 = vsel %vm623, %v1423, %v1422
      %v1425 = vrot.slane %v1404, 2
      %v1426 = vsel %vm626, %v1425, %v1424
      %v1427 = vrot.slane %v1405, 1
      %v1428 = vsel %vm608, %v1406, %v1427
      %v1429 = vrot.slane %v1407, 7
      %v1430 = vsel %vm611, %v1429, %v1428
      %v1431 = vrot.slane %v1408, 6
      %v1432 = vsel %vm614, %v1431, %v1430
      %v1433 = vrot.slane %v1409, 5
      %v1434 = vsel %vm617, %v1433, %v1432
      %v1435 = vrot.slane %v1410, 4
      %v1436 = vsel %vm620, %v1435, %v1434
      %v1437 = vrot.slane %v1411, 3
      %v1438 = vsel %vm623, %v1437, %v1436
      %v1439 = vrot.slane %v1412, 2
      %v1440 = vsel %vm626, %v1439, %v1438
      %v1441 = vpack.c.b16 %v1440, %v1426
      %v1443 = vsel %vm643, %v1441, 0
      %v1446 = vand.u32 %v1268, %v649
      %1448 = vmatprep.subr.bf16.mxu0 0
      %1449 = vmatpush1.bf16.msra.mxu0 %v1446
      %1450 = vmatprep.subr.bf16.mxu0 0
      %1451 = vmatpush1.bf16.msra.mxu0 0
      %1452 = vmatprep.subr.bf16.mxu0 0
      %1453 = vmatpush1.bf16.msra.mxu0 0
      %1454 = vmatprep.subr.bf16.mxu0 0
      %1455 = vmatpush1.bf16.msra.mxu0 0
      %1456 = vmatprep.subr.bf16.mxu0 0
      %1457 = vmatpush1.bf16.msra.mxu0 0
      %1458 = vmatprep.subr.bf16.mxu0 0
      %1459 = vmatpush1.bf16.msra.mxu0 0
      %1460 = vmatprep.subr.bf16.mxu0 0
      %1461 = vmatpush1.bf16.msra.mxu0 0
      %1462 = vmatprep.subr.bf16.mxu0 0
      %1463 = vmatpush1.bf16.msra.mxu0 0
      %1464 = vmatprep.subr.bf16.mxu0 0
      %1465 = vmatpush1.bf16.msra.mxu0 0
      %1466 = vmatprep.subr.bf16.mxu0 0
      %1467 = vmatpush1.bf16.msra.mxu0 0
      %1468 = vmatprep.subr.bf16.mxu0 0
      %1469 = vmatpush1.bf16.msra.mxu0 0
      %1470 = vmatprep.subr.bf16.mxu0 0
      %1471 = vmatpush1.bf16.msra.mxu0 0
      %1472 = vmatprep.subr.bf16.mxu0 0
      %1473 = vmatpush1.bf16.msra.mxu0 0
      %1474 = vmatprep.subr.bf16.mxu0 0
      %1475 = vmatpush1.bf16.msra.mxu0 0
      %1476 = vmatprep.subr.bf16.mxu0 0
      %1477 = vmatpush1.bf16.msra.mxu0 0
      %1478 = vmatprep.subr.bf16.mxu0 0
      %1479 = vmatpush1.bf16.msra.mxu0 0
      %1480 = vmatprep.mubr.bf16.mxu0 0
      %1481 = vmatmul.mubr.bf16.gmra.mrb[0].mxu0 %v1443
      %v1482 = vpop.f32.mrb[0].mxu0
      %v1483 = vadd.f32 0.0, %v1482
      %v1484 = vpop.f32.mrb[0].mxu0
      %v1485 = vpop.f32.mrb[0].mxu0
      %v1486 = vadd.f32 0.0, %v1485
      %v1487 = vpop.f32.mrb[0].mxu0
      %1488 = vdwg.mxu0
      %v1489 = vadd.f32 %v1249, %v1483
      %v1490 = vadd.f32 %v1250, %v1486
      %v1491 = vld [vmem:[%s1010] sm:$0x2]
      %v1492 = vld [vmem:[%s1010 + $0x2] sm:$0x2]
      %v1493 = vld [vmem:[%s1010 + $0x4] sm:$0x2]
      %v1494 = vld [vmem:[%s1010 + $0x6] sm:$0x2]
      %v1495 = vld [vmem:[%s1010 + $0x8] sm:$0x2]
      %v1496 = vld [vmem:[%s1010 + $0xa] sm:$0x2]
      %v1497 = vld [vmem:[%s1010 + $0xc] sm:$0x2]
      %v1498 = vld [vmem:[%s1010 + $0xe] sm:$0x2]
      %v1499 = vld [vmem:[%s1010 + $0x10] sm:$0x2]
      %v1500 = vld [vmem:[%s1010 + $0x12] sm:$0x2]
      %v1501 = vld [vmem:[%s1010 + $0x14] sm:$0x2]
      %v1502 = vld [vmem:[%s1010 + $0x16] sm:$0x2]
      %v1503 = vld [vmem:[%s1010 + $0x18] sm:$0x2]
      %v1504 = vld [vmem:[%s1010 + $0x1a] sm:$0x2]
      %v1505 = vld [vmem:[%s1010 + $0x1c] sm:$0x2]
      %v1506 = vld [vmem:[%s1010 + $0x1e] sm:$0x2]
      %s1507 = scalar_lea.vmem %s2, 5
      %v1508 = vld [vmem:[%s1507] sm:$0x1]
      %v1526 = vunpack.c.l.s4 1983009808
      %v1527 = vunpack.c.0.s8 %v1526
      %v1528 = vlaneseq
      %v1529 = vshrl.u32 %v1528, 7
      %v1530 = vsub.s32 %v1527, %v1529
      %v1531 = vrot.slane %v1491, %v1530
      %v1533 = vunpack.c.l.s4 1983009808
      %v1534 = vunpack.c.0.s8 %v1533
      %v1535 = vlaneseq
      %v1536 = vshrl.u32 %v1535, 7
      %v1537 = vsub.s32 %v1534, %v1536
      %v1538 = vrot.slane %v1492, %v1537
      %v1540 = vunpack.c.l.s4 1983009808
      %v1541 = vunpack.c.0.s8 %v1540
      %v1542 = vlaneseq
      %v1543 = vshrl.u32 %v1542, 7
      %v1544 = vsub.s32 %v1541, %v1543
      %v1545 = vrot.slane %v1493, %v1544
      %v1547 = vunpack.c.l.s4 1983009808
      %v1548 = vunpack.c.0.s8 %v1547
      %v1549 = vlaneseq
      %v1550 = vshrl.u32 %v1549, 7
      %v1551 = vsub.s32 %v1548, %v1550
      %v1552 = vrot.slane %v1494, %v1551
      %v1554 = vunpack.c.l.s4 1983009808
      %v1555 = vunpack.c.0.s8 %v1554
      %v1556 = vlaneseq
      %v1557 = vshrl.u32 %v1556, 7
      %v1558 = vsub.s32 %v1555, %v1557
      %v1559 = vrot.slane %v1495, %v1558
      %v1561 = vunpack.c.l.s4 1983009808
      %v1562 = vunpack.c.0.s8 %v1561
      %v1563 = vlaneseq
      %v1564 = vshrl.u32 %v1563, 7
      %v1565 = vsub.s32 %v1562, %v1564
      %v1566 = vrot.slane %v1496, %v1565
      %v1568 = vunpack.c.l.s4 1983009808
      %v1569 = vunpack.c.0.s8 %v1568
      %v1570 = vlaneseq
      %v1571 = vshrl.u32 %v1570, 7
      %v1572 = vsub.s32 %v1569, %v1571
      %v1573 = vrot.slane %v1497, %v1572
      %v1575 = vunpack.c.l.s4 1983009808
      %v1576 = vunpack.c.0.s8 %v1575
      %v1577 = vlaneseq
      %v1578 = vshrl.u32 %v1577, 7
      %v1579 = vsub.s32 %v1576, %v1578
      %v1580 = vrot.slane %v1498, %v1579
      %v1582 = vunpack.c.l.s4 1983009808
      %v1583 = vunpack.c.0.s8 %v1582
      %v1584 = vlaneseq
      %v1585 = vshrl.u32 %v1584, 7
      %v1586 = vsub.s32 %v1583, %v1585
      %v1587 = vrot.slane %v1499, %v1586
      %v1589 = vunpack.c.l.s4 1983009808
      %v1590 = vunpack.c.0.s8 %v1589
      %v1591 = vlaneseq
      %v1592 = vshrl.u32 %v1591, 7
      %v1593 = vsub.s32 %v1590, %v1592
      %v1594 = vrot.slane %v1500, %v1593
      %v1596 = vunpack.c.l.s4 1983009808
      %v1597 = vunpack.c.0.s8 %v1596
      %v1598 = vlaneseq
      %v1599 = vshrl.u32 %v1598, 7
      %v1600 = vsub.s32 %v1597, %v1599
      %v1601 = vrot.slane %v1501, %v1600
      %v1603 = vunpack.c.l.s4 1983009808
      %v1604 = vunpack.c.0.s8 %v1603
      %v1605 = vlaneseq
      %v1606 = vshrl.u32 %v1605, 7
      %v1607 = vsub.s32 %v1604, %v1606
      %v1608 = vrot.slane %v1502, %v1607
      %v1610 = vunpack.c.l.s4 1983009808
      %v1611 = vunpack.c.0.s8 %v1610
      %v1612 = vlaneseq
      %v1613 = vshrl.u32 %v1612, 7
      %v1614 = vsub.s32 %v1611, %v1613
      %v1615 = vrot.slane %v1503, %v1614
      %v1617 = vunpack.c.l.s4 1983009808
      %v1618 = vunpack.c.0.s8 %v1617
      %v1619 = vlaneseq
      %v1620 = vshrl.u32 %v1619, 7
      %v1621 = vsub.s32 %v1618, %v1620
      %v1622 = vrot.slane %v1504, %v1621
      %v1624 = vunpack.c.l.s4 1983009808
      %v1625 = vunpack.c.0.s8 %v1624
      %v1626 = vlaneseq
      %v1627 = vshrl.u32 %v1626, 7
      %v1628 = vsub.s32 %v1625, %v1627
      %v1629 = vrot.slane %v1505, %v1628
      %v1631 = vunpack.c.l.s4 1983009808
      %v1632 = vunpack.c.0.s8 %v1631
      %v1633 = vlaneseq
      %v1634 = vshrl.u32 %v1633, 7
      %v1635 = vsub.s32 %v1632, %v1634
      %v1636 = vrot.slane %v1506, %v1635
      %v1637 = vunpack.c.l.b16 %v1531
      %v1638 = vunpack.c.l.b16 %v1538
      %v1639 = vunpack.c.l.b16 %v1545
      %v1640 = vunpack.c.l.b16 %v1552
      %v1641 = vunpack.c.l.b16 %v1559
      %v1642 = vunpack.c.l.b16 %v1566
      %v1643 = vunpack.c.l.b16 %v1573
      %v1644 = vunpack.c.l.b16 %v1580
      %v1645 = vunpack.c.l.b16 %v1587
      %v1646 = vunpack.c.l.b16 %v1594
      %v1647 = vunpack.c.l.b16 %v1601
      %v1648 = vunpack.c.l.b16 %v1608
      %v1649 = vunpack.c.l.b16 %v1615
      %v1650 = vunpack.c.l.b16 %v1622
      %v1651 = vunpack.c.l.b16 %v1629
      %v1652 = vunpack.c.l.b16 %v1636
      %v1653 = vrot.slane %v1637, 2
      %v1654 = vrot.slane %v1638, 1
      %v1655 = vsel %vm608, %v1654, %v1653
      %v1656 = vsel %vm611, %v1639, %v1655
      %v1657 = vrot.slane %v1640, 7
      %v1658 = vsel %vm614, %v1657, %v1656
      %v1659 = vrot.slane %v1641, 6
      %v1660 = vsel %vm617, %v1659, %v1658
      %v1661 = vrot.slane %v1642, 5
      %v1662 = vsel %vm620, %v1661, %v1660
      %v1663 = vrot.slane %v1643, 4
      %v1664 = vsel %vm623, %v1663, %v1662
      %v1665 = vrot.slane %v1644, 3
      %v1666 = vsel %vm626, %v1665, %v1664
      %v1667 = vrot.slane %v1645, 2
      %v1668 = vrot.slane %v1646, 1
      %v1669 = vsel %vm608, %v1668, %v1667
      %v1670 = vsel %vm611, %v1647, %v1669
      %v1671 = vrot.slane %v1648, 7
      %v1672 = vsel %vm614, %v1671, %v1670
      %v1673 = vrot.slane %v1649, 6
      %v1674 = vsel %vm617, %v1673, %v1672
      %v1675 = vrot.slane %v1650, 5
      %v1676 = vsel %vm620, %v1675, %v1674
      %v1677 = vrot.slane %v1651, 4
      %v1678 = vsel %vm623, %v1677, %v1676
      %v1679 = vrot.slane %v1652, 3
      %v1680 = vsel %vm626, %v1679, %v1678
      %v1681 = vpack.c.b16 %v1680, %v1666
      %v1683 = vsel %vm643, %v1681, 0
      %v1686 = vand.u32 %v1508, %v649
      %1688 = vmatprep.subr.bf16.mxu0 0
      %1689 = vmatpush1.bf16.msra.mxu0 %v1686
      %1690 = vmatprep.subr.bf16.mxu0 0
      %1691 = vmatpush1.bf16.msra.mxu0 0
      %1692 = vmatprep.subr.bf16.mxu0 0
      %1693 = vmatpush1.bf16.msra.mxu0 0
      %1694 = vmatprep.subr.bf16.mxu0 0
      %1695 = vmatpush1.bf16.msra.mxu0 0
      %1696 = vmatprep.subr.bf16.mxu0 0
      %1697 = vmatpush1.bf16.msra.mxu0 0
      %1698 = vmatprep.subr.bf16.mxu0 0
      %1699 = vmatpush1.bf16.msra.mxu0 0
      %1700 = vmatprep.subr.bf16.mxu0 0
      %1701 = vmatpush1.bf16.msra.mxu0 0
      %1702 = vmatprep.subr.bf16.mxu0 0
      %1703 = vmatpush1.bf16.msra.mxu0 0
      %1704 = vmatprep.subr.bf16.mxu0 0
      %1705 = vmatpush1.bf16.msra.mxu0 0
      %1706 = vmatprep.subr.bf16.mxu0 0
      %1707 = vmatpush1.bf16.msra.mxu0 0
      %1708 = vmatprep.subr.bf16.mxu0 0
      %1709 = vmatpush1.bf16.msra.mxu0 0
      %1710 = vmatprep.subr.bf16.mxu0 0
      %1711 = vmatpush1.bf16.msra.mxu0 0
      %1712 = vmatprep.subr.bf16.mxu0 0
      %1713 = vmatpush1.bf16.msra.mxu0 0
      %1714 = vmatprep.subr.bf16.mxu0 0
      %1715 = vmatpush1.bf16.msra.mxu0 0
      %1716 = vmatprep.subr.bf16.mxu0 0
      %1717 = vmatpush1.bf16.msra.mxu0 0
      %1718 = vmatprep.subr.bf16.mxu0 0
      %1719 = vmatpush1.bf16.msra.mxu0 0
      %1720 = vmatprep.mubr.bf16.mxu0 0
      %1721 = vmatmul.mubr.bf16.gmra.mrb[0].mxu0 %v1683
      %v1722 = vpop.f32.mrb[0].mxu0
      %v1723 = vadd.f32 0.0, %v1722
      %v1724 = vpop.f32.mrb[0].mxu0
      %v1725 = vpop.f32.mrb[0].mxu0
      %v1726 = vadd.f32 0.0, %v1725
      %v1727 = vpop.f32.mrb[0].mxu0
      %1728 = vdwg.mxu0
      %v1729 = vadd.f32 %v1489, %v1723
      %v1730 = vadd.f32 %v1490, %v1726
      %s1731 = scalar_lea.vmem [#allocation2], 4
      %v1732 = vld [vmem:[%s1731] sm:$0x1]
      %v1733 = vld [vmem:[%s1731 + $0x2] sm:$0x1]
      %v1734 = vld [vmem:[%s1731 + $0x4] sm:$0x1]
      %v1735 = vld [vmem:[%s1731 + $0x6] sm:$0x1]
      %v1736 = vld [vmem:[%s1731 + $0x8] sm:$0x1]
      %v1737 = vld [vmem:[%s1731 + $0xa] sm:$0x1]
      %v1738 = vld [vmem:[%s1731 + $0xc] sm:$0x1]
      %v1739 = vld [vmem:[%s1731 + $0xe] sm:$0x1]
      %v1740 = vld [vmem:[%s1731 + $0x10] sm:$0x1]
      %v1741 = vld [vmem:[%s1731 + $0x12] sm:$0x1]
      %v1742 = vld [vmem:[%s1731 + $0x14] sm:$0x1]
      %v1743 = vld [vmem:[%s1731 + $0x16] sm:$0x1]
      %v1744 = vld [vmem:[%s1731 + $0x18] sm:$0x1]
      %v1745 = vld [vmem:[%s1731 + $0x1a] sm:$0x1]
      %v1746 = vld [vmem:[%s1731 + $0x1c] sm:$0x1]
      %v1747 = vld [vmem:[%s1731 + $0x1e] sm:$0x1]
      %s1748 = scalar_lea.vmem %s2, 6
      %v1749 = vld [vmem:[%s1748] sm:$0x1]
      %v1767 = vunpack.c.l.s4 1983009808
      %v1768 = vunpack.c.0.s8 %v1767
      %v1769 = vlaneseq
      %v1770 = vshrl.u32 %v1769, 7
      %v1771 = vsub.s32 %v1768, %v1770
      %v1772 = vrot.slane %v1732, %v1771
      %v1774 = vunpack.c.l.s4 1983009808
      %v1775 = vunpack.c.0.s8 %v1774
      %v1776 = vlaneseq
      %v1777 = vshrl.u32 %v1776, 7
      %v1778 = vsub.s32 %v1775, %v1777
      %v1779 = vrot.slane %v1733, %v1778
      %v1781 = vunpack.c.l.s4 1983009808
      %v1782 = vunpack.c.0.s8 %v1781
      %v1783 = vlaneseq
      %v1784 = vshrl.u32 %v1783, 7
      %v1785 = vsub.s32 %v1782, %v1784
      %v1786 = vrot.slane %v1734, %v1785
      %v1788 = vunpack.c.l.s4 1983009808
      %v1789 = vunpack.c.0.s8 %v1788
      %v1790 = vlaneseq
      %v1791 = vshrl.u32 %v1790, 7
      %v1792 = vsub.s32 %v1789, %v1791
      %v1793 = vrot.slane %v1735, %v1792
      %v1795 = vunpack.c.l.s4 1983009808
      %v1796 = vunpack.c.0.s8 %v1795
      %v1797 = vlaneseq
      %v1798 = vshrl.u32 %v1797, 7
      %v1799 = vsub.s32 %v1796, %v1798
      %v1800 = vrot.slane %v1736, %v1799
      %v1802 = vunpack.c.l.s4 1983009808
      %v1803 = vunpack.c.0.s8 %v1802
      %v1804 = vlaneseq
      %v1805 = vshrl.u32 %v1804, 7
      %v1806 = vsub.s32 %v1803, %v1805
      %v1807 = vrot.slane %v1737, %v1806
      %v1809 = vunpack.c.l.s4 1983009808
      %v1810 = vunpack.c.0.s8 %v1809
      %v1811 = vlaneseq
      %v1812 = vshrl.u32 %v1811, 7
      %v1813 = vsub.s32 %v1810, %v1812
      %v1814 = vrot.slane %v1738, %v1813
      %v1816 = vunpack.c.l.s4 1983009808
      %v1817 = vunpack.c.0.s8 %v1816
      %v1818 = vlaneseq
      %v1819 = vshrl.u32 %v1818, 7
      %v1820 = vsub.s32 %v1817, %v1819
      %v1821 = vrot.slane %v1739, %v1820
      %v1823 = vunpack.c.l.s4 1983009808
      %v1824 = vunpack.c.0.s8 %v1823
      %v1825 = vlaneseq
      %v1826 = vshrl.u32 %v1825, 7
      %v1827 = vsub.s32 %v1824, %v1826
      %v1828 = vrot.slane %v1740, %v1827
      %v1830 = vunpack.c.l.s4 1983009808
      %v1831 = vunpack.c.0.s8 %v1830
      %v1832 = vlaneseq
      %v1833 = vshrl.u32 %v1832, 7
      %v1834 = vsub.s32 %v1831, %v1833
      %v1835 = vrot.slane %v1741, %v1834
      %v1837 = vunpack.c.l.s4 1983009808
      %v1838 = vunpack.c.0.s8 %v1837
      %v1839 = vlaneseq
      %v1840 = vshrl.u32 %v1839, 7
      %v1841 = vsub.s32 %v1838, %v1840
      %v1842 = vrot.slane %v1742, %v1841
      %v1844 = vunpack.c.l.s4 1983009808
      %v1845 = vunpack.c.0.s8 %v1844
      %v1846 = vlaneseq
      %v1847 = vshrl.u32 %v1846, 7
      %v1848 = vsub.s32 %v1845, %v1847
      %v1849 = vrot.slane %v1743, %v1848
      %v1851 = vunpack.c.l.s4 1983009808
      %v1852 = vunpack.c.0.s8 %v1851
      %v1853 = vlaneseq
      %v1854 = vshrl.u32 %v1853, 7
      %v1855 = vsub.s32 %v1852, %v1854
      %v1856 = vrot.slane %v1744, %v1855
      %v1858 = vunpack.c.l.s4 1983009808
      %v1859 = vunpack.c.0.s8 %v1858
      %v1860 = vlaneseq
      %v1861 = vshrl.u32 %v1860, 7
      %v1862 = vsub.s32 %v1859, %v1861
      %v1863 = vrot.slane %v1745, %v1862
      %v1865 = vunpack.c.l.s4 1983009808
      %v1866 = vunpack.c.0.s8 %v1865
      %v1867 = vlaneseq
      %v1868 = vshrl.u32 %v1867, 7
      %v1869 = vsub.s32 %v1866, %v1868
      %v1870 = vrot.slane %v1746, %v1869
      %v1872 = vunpack.c.l.s4 1983009808
      %v1873 = vunpack.c.0.s8 %v1872
      %v1874 = vlaneseq
      %v1875 = vshrl.u32 %v1874, 7
      %v1876 = vsub.s32 %v1873, %v1875
      %v1877 = vrot.slane %v1747, %v1876
      %v1878 = vunpack.c.l.b16 %v1772
      %v1879 = vunpack.c.l.b16 %v1779
      %v1880 = vunpack.c.l.b16 %v1786
      %v1881 = vunpack.c.l.b16 %v1793
      %v1882 = vunpack.c.l.b16 %v1800
      %v1883 = vunpack.c.l.b16 %v1807
      %v1884 = vunpack.c.l.b16 %v1814
      %v1885 = vunpack.c.l.b16 %v1821
      %v1886 = vunpack.c.l.b16 %v1828
      %v1887 = vunpack.c.l.b16 %v1835
      %v1888 = vunpack.c.l.b16 %v1842
      %v1889 = vunpack.c.l.b16 %v1849
      %v1890 = vunpack.c.l.b16 %v1856
      %v1891 = vunpack.c.l.b16 %v1863
      %v1892 = vunpack.c.l.b16 %v1870
      %v1893 = vunpack.c.l.b16 %v1877
      %v1894 = vrot.slane %v1879, 7
      %v1895 = vsel %vm608, %v1894, %v1878
      %v1896 = vrot.slane %v1880, 6
      %v1897 = vsel %vm611, %v1896, %v1895
      %v1898 = vrot.slane %v1881, 5
      %v1899 = vsel %vm614, %v1898, %v1897
      %v1900 = vrot.slane %v1882, 4
      %v1901 = vsel %vm617, %v1900, %v1899
      %v1902 = vrot.slane %v1883, 3
      %v1903 = vsel %vm620, %v1902, %v1901
      %v1904 = vrot.slane %v1884, 2
      %v1905 = vsel %vm623, %v1904, %v1903
      %v1906 = vrot.slane %v1885, 1
      %v1907 = vsel %vm626, %v1906, %v1905
      %v1908 = vrot.slane %v1887, 7
      %v1909 = vsel %vm608, %v1908, %v1886
      %v1910 = vrot.slane %v1888, 6
      %v1911 = vsel %vm611, %v1910, %v1909
      %v1912 = vrot.slane %v1889, 5
      %v1913 = vsel %vm614, %v1912, %v1911
      %v1914 = vrot.slane %v1890, 4
      %v1915 = vsel %vm617, %v1914, %v1913
      %v1916 = vrot.slane %v1891, 3
      %v1917 = vsel %vm620, %v1916, %v1915
      %v1918 = vrot.slane %v1892, 2
      %v1919 = vsel %vm623, %v1918, %v1917
      %v1920 = vrot.slane %v1893, 1
      %v1921 = vsel %vm626, %v1920, %v1919
      %v1922 = vpack.c.b16 %v1921, %v1907
      %v1924 = vsel %vm643, %v1922, 0
      %v1927 = vand.u32 %v1749, %v649
      %1929 = vmatprep.subr.bf16.mxu0 0
      %1930 = vmatpush1.bf16.msra.mxu0 %v1927
      %1931 = vmatprep.subr.bf16.mxu0 0
      %1932 = vmatpush1.bf16.msra.mxu0 0
      %1933 = vmatprep.subr.bf16.mxu0 0
      %1934 = vmatpush1.bf16.msra.mxu0 0
      %1935 = vmatprep.subr.bf16.mxu0 0
      %1936 = vmatpush1.bf16.msra.mxu0 0
      %1937 = vmatprep.subr.bf16.mxu0 0
      %1938 = vmatpush1.bf16.msra.mxu0 0
      %1939 = vmatprep.subr.bf16.mxu0 0
      %1940 = vmatpush1.bf16.msra.mxu0 0
      %1941 = vmatprep.subr.bf16.mxu0 0
      %1942 = vmatpush1.bf16.msra.mxu0 0
      %1943 = vmatprep.subr.bf16.mxu0 0
      %1944 = vmatpush1.bf16.msra.mxu0 0
      %1945 = vmatprep.subr.bf16.mxu0 0
      %1946 = vmatpush1.bf16.msra.mxu0 0
      %1947 = vmatprep.subr.bf16.mxu0 0
      %1948 = vmatpush1.bf16.msra.mxu0 0
      %1949 = vmatprep.subr.bf16.mxu0 0
      %1950 = vmatpush1.bf16.msra.mxu0 0
      %1951 = vmatprep.subr.bf16.mxu0 0
      %1952 = vmatpush1.bf16.msra.mxu0 0
      %1953 = vmatprep.subr.bf16.mxu0 0
      %1954 = vmatpush1.bf16.msra.mxu0 0
      %1955 = vmatprep.subr.bf16.mxu0 0
      %1956 = vmatpush1.bf16.msra.mxu0 0
      %1957 = vmatprep.subr.bf16.mxu0 0
      %1958 = vmatpush1.bf16.msra.mxu0 0
      %1959 = vmatprep.subr.bf16.mxu0 0
      %1960 = vmatpush1.bf16.msra.mxu0 0
      %1961 = vmatprep.mubr.bf16.mxu0 0
      %1962 = vmatmul.mubr.bf16.gmra.mrb[0].mxu0 %v1924
      %v1963 = vpop.f32.mrb[0].mxu0
      %v1964 = vadd.f32 0.0, %v1963
      %v1965 = vpop.f32.mrb[0].mxu0
      %v1966 = vpop.f32.mrb[0].mxu0
      %v1967 = vadd.f32 0.0, %v1966
      %v1968 = vpop.f32.mrb[0].mxu0
      %1969 = vdwg.mxu0
      %v1970 = vadd.f32 %v1729, %v1964
      %v1971 = vadd.f32 %v1730, %v1967
      %v1972 = vld [vmem:[%s1731] sm:$0x1]
      %v1973 = vld [vmem:[%s1731 + $0x2] sm:$0x1]
      %v1974 = vld [vmem:[%s1731 + $0x4] sm:$0x1]
      %v1975 = vld [vmem:[%s1731 + $0x6] sm:$0x1]
      %v1976 = vld [vmem:[%s1731 + $0x8] sm:$0x1]
      %v1977 = vld [vmem:[%s1731 + $0xa] sm:$0x1]
      %v1978 = vld [vmem:[%s1731 + $0xc] sm:$0x1]
      %v1979 = vld [vmem:[%s1731 + $0xe] sm:$0x1]
      %v1980 = vld [vmem:[%s1731 + $0x10] sm:$0x1]
      %v1981 = vld [vmem:[%s1731 + $0x12] sm:$0x1]
      %v1982 = vld [vmem:[%s1731 + $0x14] sm:$0x1]
      %v1983 = vld [vmem:[%s1731 + $0x16] sm:$0x1]
      %v1984 = vld [vmem:[%s1731 + $0x18] sm:$0x1]
      %v1985 = vld [vmem:[%s1731 + $0x1a] sm:$0x1]
      %v1986 = vld [vmem:[%s1731 + $0x1c] sm:$0x1]
      %v1987 = vld [vmem:[%s1731 + $0x1e] sm:$0x1]
      %s1988 = scalar_lea.vmem %s2, 7
      %v1989 = vld [vmem:[%s1988] sm:$0x1]
      %v2007 = vunpack.c.l.s4 1983009808
      %v2008 = vunpack.c.0.s8 %v2007
      %v2009 = vlaneseq
      %v2010 = vshrl.u32 %v2009, 7
      %v2011 = vsub.s32 %v2008, %v2010
      %v2012 = vrot.slane %v1972, %v2011
      %v2014 = vunpack.c.l.s4 1983009808
      %v2015 = vunpack.c.0.s8 %v2014
      %v2016 = vlaneseq
      %v2017 = vshrl.u32 %v2016, 7
      %v2018 = vsub.s32 %v2015, %v2017
      %v2019 = vrot.slane %v1973, %v2018
      %v2021 = vunpack.c.l.s4 1983009808
      %v2022 = vunpack.c.0.s8 %v2021
      %v2023 = vlaneseq
      %v2024 = vshrl.u32 %v2023, 7
      %v2025 = vsub.s32 %v2022, %v2024
      %v2026 = vrot.slane %v1974, %v2025
      %v2028 = vunpack.c.l.s4 1983009808
      %v2029 = vunpack.c.0.s8 %v2028
      %v2030 = vlaneseq
      %v2031 = vshrl.u32 %v2030, 7
      %v2032 = vsub.s32 %v2029, %v2031
      %v2033 = vrot.slane %v1975, %v2032
      %v2035 = vunpack.c.l.s4 1983009808
      %v2036 = vunpack.c.0.s8 %v2035
      %v2037 = vlaneseq
      %v2038 = vshrl.u32 %v2037, 7
      %v2039 = vsub.s32 %v2036, %v2038
      %v2040 = vrot.slane %v1976, %v2039
      %v2042 = vunpack.c.l.s4 1983009808
      %v2043 = vunpack.c.0.s8 %v2042
      %v2044 = vlaneseq
      %v2045 = vshrl.u32 %v2044, 7
      %v2046 = vsub.s32 %v2043, %v2045
      %v2047 = vrot.slane %v1977, %v2046
      %v2049 = vunpack.c.l.s4 1983009808
      %v2050 = vunpack.c.0.s8 %v2049
      %v2051 = vlaneseq
      %v2052 = vshrl.u32 %v2051, 7
      %v2053 = vsub.s32 %v2050, %v2052
      %v2054 = vrot.slane %v1978, %v2053
      %v2056 = vunpack.c.l.s4 1983009808
      %v2057 = vunpack.c.0.s8 %v2056
      %v2058 = vlaneseq
      %v2059 = vshrl.u32 %v2058, 7
      %v2060 = vsub.s32 %v2057, %v2059
      %v2061 = vrot.slane %v1979, %v2060
      %v2063 = vunpack.c.l.s4 1983009808
      %v2064 = vunpack.c.0.s8 %v2063
      %v2065 = vlaneseq
      %v2066 = vshrl.u32 %v2065, 7
      %v2067 = vsub.s32 %v2064, %v2066
      %v2068 = vrot.slane %v1980, %v2067
      %v2070 = vunpack.c.l.s4 1983009808
      %v2071 = vunpack.c.0.s8 %v2070
      %v2072 = vlaneseq
      %v2073 = vshrl.u32 %v2072, 7
      %v2074 = vsub.s32 %v2071, %v2073
      %v2075 = vrot.slane %v1981, %v2074
      %v2077 = vunpack.c.l.s4 1983009808
      %v2078 = vunpack.c.0.s8 %v2077
      %v2079 = vlaneseq
      %v2080 = vshrl.u32 %v2079, 7
      %v2081 = vsub.s32 %v2078, %v2080
      %v2082 = vrot.slane %v1982, %v2081
      %v2084 = vunpack.c.l.s4 1983009808
      %v2085 = vunpack.c.0.s8 %v2084
      %v2086 = vlaneseq
      %v2087 = vshrl.u32 %v2086, 7
      %v2088 = vsub.s32 %v2085, %v2087
      %v2089 = vrot.slane %v1983, %v2088
      %v2091 = vunpack.c.l.s4 1983009808
      %v2092 = vunpack.c.0.s8 %v2091
      %v2093 = vlaneseq
      %v2094 = vshrl.u32 %v2093, 7
      %v2095 = vsub.s32 %v2092, %v2094
      %v2096 = vrot.slane %v1984, %v2095
      %v2098 = vunpack.c.l.s4 1983009808
      %v2099 = vunpack.c.0.s8 %v2098
      %v2100 = vlaneseq
      %v2101 = vshrl.u32 %v2100, 7
      %v2102 = vsub.s32 %v2099, %v2101
      %v2103 = vrot.slane %v1985, %v2102
      %v2105 = vunpack.c.l.s4 1983009808
      %v2106 = vunpack.c.0.s8 %v2105
      %v2107 = vlaneseq
      %v2108 = vshrl.u32 %v2107, 7
      %v2109 = vsub.s32 %v2106, %v2108
      %v2110 = vrot.slane %v1986, %v2109
      %v2112 = vunpack.c.l.s4 1983009808
      %v2113 = vunpack.c.0.s8 %v2112
      %v2114 = vlaneseq
      %v2115 = vshrl.u32 %v2114, 7
      %v2116 = vsub.s32 %v2113, %v2115
      %v2117 = vrot.slane %v1987, %v2116
      %v2118 = vunpack.c.l.b16 %v2012
      %v2119 = vunpack.c.l.b16 %v2019
      %v2120 = vunpack.c.l.b16 %v2026
      %v2121 = vunpack.c.l.b16 %v2033
      %v2122 = vunpack.c.l.b16 %v2040
      %v2123 = vunpack.c.l.b16 %v2047
      %v2124 = vunpack.c.l.b16 %v2054
      %v2125 = vunpack.c.l.b16 %v2061
      %v2126 = vunpack.c.l.b16 %v2068
      %v2127 = vunpack.c.l.b16 %v2075
      %v2128 = vunpack.c.l.b16 %v2082
      %v2129 = vunpack.c.l.b16 %v2089
      %v2130 = vunpack.c.l.b16 %v2096
      %v2131 = vunpack.c.l.b16 %v2103
      %v2132 = vunpack.c.l.b16 %v2110
      %v2133 = vunpack.c.l.b16 %v2117
      %v2134 = vrot.slane %v2118, 1
      %v2135 = vsel %vm608, %v2119, %v2134
      %v2136 = vrot.slane %v2120, 7
      %v2137 = vsel %vm611, %v2136, %v2135
      %v2138 = vrot.slane %v2121, 6
      %v2139 = vsel %vm614, %v2138, %v2137
      %v2140 = vrot.slane %v2122, 5
      %v2141 = vsel %vm617, %v2140, %v2139
      %v2142 = vrot.slane %v2123, 4
      %v2143 = vsel %vm620, %v2142, %v2141
      %v2144 = vrot.slane %v2124, 3
      %v2145 = vsel %vm623, %v2144, %v2143
      %v2146 = vrot.slane %v2125, 2
      %v2147 = vsel %vm626, %v2146, %v2145
      %v2148 = vrot.slane %v2126, 1
      %v2149 = vsel %vm608, %v2127, %v2148
      %v2150 = vrot.slane %v2128, 7
      %v2151 = vsel %vm611, %v2150, %v2149
      %v2152 = vrot.slane %v2129, 6
      %v2153 = vsel %vm614, %v2152, %v2151
      %v2154 = vrot.slane %v2130, 5
      %v2155 = vsel %vm617, %v2154, %v2153
      %v2156 = vrot.slane %v2131, 4
      %v2157 = vsel %vm620, %v2156, %v2155
      %v2158 = vrot.slane %v2132, 3
      %v2159 = vsel %vm623, %v2158, %v2157
      %v2160 = vrot.slane %v2133, 2
      %v2161 = vsel %vm626, %v2160, %v2159
      %v2162 = vpack.c.b16 %v2161, %v2147
      %v2164 = vsel %vm643, %v2162, 0
      %v2167 = vand.u32 %v1989, %v649
      %2169 = vmatprep.subr.bf16.mxu0 0
      %2170 = vmatpush1.bf16.msra.mxu0 %v2167
      %2171 = vmatprep.subr.bf16.mxu0 0
      %2172 = vmatpush1.bf16.msra.mxu0 0
      %2173 = vmatprep.subr.bf16.mxu0 0
      %2174 = vmatpush1.bf16.msra.mxu0 0
      %2175 = vmatprep.subr.bf16.mxu0 0
      %2176 = vmatpush1.bf16.msra.mxu0 0
      %2177 = vmatprep.subr.bf16.mxu0 0
      %2178 = vmatpush1.bf16.msra.mxu0 0
      %2179 = vmatprep.subr.bf16.mxu0 0
      %2180 = vmatpush1.bf16.msra.mxu0 0
      %2181 = vmatprep.subr.bf16.mxu0 0
      %2182 = vmatpush1.bf16.msra.mxu0 0
      %2183 = vmatprep.subr.bf16.mxu0 0
      %2184 = vmatpush1.bf16.msra.mxu0 0
      %2185 = vmatprep.subr.bf16.mxu0 0
      %2186 = vmatpush1.bf16.msra.mxu0 0
      %2187 = vmatprep.subr.bf16.mxu0 0
      %2188 = vmatpush1.bf16.msra.mxu0 0
      %2189 = vmatprep.subr.bf16.mxu0 0
      %2190 = vmatpush1.bf16.msra.mxu0 0
      %2191 = vmatprep.subr.bf16.mxu0 0
      %2192 = vmatpush1.bf16.msra.mxu0 0
      %2193 = vmatprep.subr.bf16.mxu0 0
      %2194 = vmatpush1.bf16.msra.mxu0 0
      %2195 = vmatprep.subr.bf16.mxu0 0
      %2196 = vmatpush1.bf16.msra.mxu0 0
      %2197 = vmatprep.subr.bf16.mxu0 0
      %2198 = vmatpush1.bf16.msra.mxu0 0
      %2199 = vmatprep.subr.bf16.mxu0 0
      %2200 = vmatpush1.bf16.msra.mxu0 0
      %2201 = vmatprep.mubr.bf16.mxu0 0
      %2202 = vmatmul.mubr.bf16.gmra.mrb[0].mxu0 %v2164
      %v2203 = vpop.f32.mrb[0].mxu0
      %v2204 = vadd.f32 0.0, %v2203
      %v2205 = vpop.f32.mrb[0].mxu0
      %v2206 = vpop.f32.mrb[0].mxu0
      %v2207 = vadd.f32 0.0, %v2206
      %v2208 = vpop.f32.mrb[0].mxu0
      %2209 = vdwg.mxu0
      %v2210 = vadd.f32 %v1970, %v2204
      %v2211 = vadd.f32 %v1971, %v2207
      %v2212 = vld [vmem:[%s1731] sm:$0x2]
      %v2213 = vld [vmem:[%s1731 + $0x2] sm:$0x2]
      %v2214 = vld [vmem:[%s1731 + $0x4] sm:$0x2]
      %v2215 = vld [vmem:[%s1731 + $0x6] sm:$0x2]
      %v2216 = vld [vmem:[%s1731 + $0x8] sm:$0x2]
      %v2217 = vld [vmem:[%s1731 + $0xa] sm:$0x2]
      %v2218 = vld [vmem:[%s1731 + $0xc] sm:$0x2]
      %v2219 = vld [vmem:[%s1731 + $0xe] sm:$0x2]
      %v2220 = vld [vmem:[%s1731 + $0x10] sm:$0x2]
      %v2221 = vld [vmem:[%s1731 + $0x12] sm:$0x2]
      %v2222 = vld [vmem:[%s1731 + $0x14] sm:$0x2]
      %v2223 = vld [vmem:[%s1731 + $0x16] sm:$0x2]
      %v2224 = vld [vmem:[%s1731 + $0x18] sm:$0x2]
      %v2225 = vld [vmem:[%s1731 + $0x1a] sm:$0x2]
      %v2226 = vld [vmem:[%s1731 + $0x1c] sm:$0x2]
      %v2227 = vld [vmem:[%s1731 + $0x1e] sm:$0x2]
      %s2228 = scalar_lea.vmem %s2, 8
      %v2229 = vld [vmem:[%s2228] sm:$0x1]
      %v2247 = vunpack.c.l.s4 1983009808
      %v2248 = vunpack.c.0.s8 %v2247
      %v2249 = vlaneseq
      %v2250 = vshrl.u32 %v2249, 7
      %v2251 = vsub.s32 %v2248, %v2250
      %v2252 = vrot.slane %v2212, %v2251
      %v2254 = vunpack.c.l.s4 1983009808
      %v2255 = vunpack.c.0.s8 %v2254
      %v2256 = vlaneseq
      %v2257 = vshrl.u32 %v2256, 7
      %v2258 = vsub.s32 %v2255, %v2257
      %v2259 = vrot.slane %v2213, %v2258
      %v2261 = vunpack.c.l.s4 1983009808
      %v2262 = vunpack.c.0.s8 %v2261
      %v2263 = vlaneseq
      %v2264 = vshrl.u32 %v2263, 7
      %v2265 = vsub.s32 %v2262, %v2264
      %v2266 = vrot.slane %v2214, %v2265
      %v2268 = vunpack.c.l.s4 1983009808
      %v2269 = vunpack.c.0.s8 %v2268
      %v2270 = vlaneseq
      %v2271 = vshrl.u32 %v2270, 7
      %v2272 = vsub.s32 %v2269, %v2271
      %v2273 = vrot.slane %v2215, %v2272
      %v2275 = vunpack.c.l.s4 1983009808
      %v2276 = vunpack.c.0.s8 %v2275
      %v2277 = vlaneseq
      %v2278 = vshrl.u32 %v2277, 7
      %v2279 = vsub.s32 %v2276, %v2278
      %v2280 = vrot.slane %v2216, %v2279
      %v2282 = vunpack.c.l.s4 1983009808
      %v2283 = vunpack.c.0.s8 %v2282
      %v2284 = vlaneseq
      %v2285 = vshrl.u32 %v2284, 7
      %v2286 = vsub.s32 %v2283, %v2285
      %v2287 = vrot.slane %v2217, %v2286
      %v2289 = vunpack.c.l.s4 1983009808
      %v2290 = vunpack.c.0.s8 %v2289
      %v2291 = vlaneseq
      %v2292 = vshrl.u32 %v2291, 7
      %v2293 = vsub.s32 %v2290, %v2292
      %v2294 = vrot.slane %v2218, %v2293
      %v2296 = vunpack.c.l.s4 1983009808
      %v2297 = vunpack.c.0.s8 %v2296
      %v2298 = vlaneseq
      %v2299 = vshrl.u32 %v2298, 7
      %v2300 = vsub.s32 %v2297, %v2299
      %v2301 = vrot.slane %v2219, %v2300
      %v2303 = vunpack.c.l.s4 1983009808
      %v2304 = vunpack.c.0.s8 %v2303
      %v2305 = vlaneseq
      %v2306 = vshrl.u32 %v2305, 7
      %v2307 = vsub.s32 %v2304, %v2306
      %v2308 = vrot.slane %v2220, %v2307
      %v2310 = vunpack.c.l.s4 1983009808
      %v2311 = vunpack.c.0.s8 %v2310
      %v2312 = vlaneseq
      %v2313 = vshrl.u32 %v2312, 7
      %v2314 = vsub.s32 %v2311, %v2313
      %v2315 = vrot.slane %v2221, %v2314
      %v2317 = vunpack.c.l.s4 1983009808
      %v2318 = vunpack.c.0.s8 %v2317
      %v2319 = vlaneseq
      %v2320 = vshrl.u32 %v2319, 7
      %v2321 = vsub.s32 %v2318, %v2320
      %v2322 = vrot.slane %v2222, %v2321
      %v2324 = vunpack.c.l.s4 1983009808
      %v2325 = vunpack.c.0.s8 %v2324
      %v2326 = vlaneseq
      %v2327 = vshrl.u32 %v2326, 7
      %v2328 = vsub.s32 %v2325, %v2327
      %v2329 = vrot.slane %v2223, %v2328
      %v2331 = vunpack.c.l.s4 1983009808
      %v2332 = vunpack.c.0.s8 %v2331
      %v2333 = vlaneseq
      %v2334 = vshrl.u32 %v2333, 7
      %v2335 = vsub.s32 %v2332, %v2334
      %v2336 = vrot.slane %v2224, %v2335
      %v2338 = vunpack.c.l.s4 1983009808
      %v2339 = vunpack.c.0.s8 %v2338
      %v2340 = vlaneseq
      %v2341 = vshrl.u32 %v2340, 7
      %v2342 = vsub.s32 %v2339, %v2341
      %v2343 = vrot.slane %v2225, %v2342
      %v2345 = vunpack.c.l.s4 1983009808
      %v2346 = vunpack.c.0.s8 %v2345
      %v2347 = vlaneseq
      %v2348 = vshrl.u32 %v2347, 7
      %v2349 = vsub.s32 %v2346, %v2348
      %v2350 = vrot.slane %v2226, %v2349
      %v2352 = vunpack.c.l.s4 1983009808
      %v2353 = vunpack.c.0.s8 %v2352
      %v2354 = vlaneseq
      %v2355 = vshrl.u32 %v2354, 7
      %v2356 = vsub.s32 %v2353, %v2355
      %v2357 = vrot.slane %v2227, %v2356
      %v2358 = vunpack.c.l.b16 %v2252
      %v2359 = vunpack.c.l.b16 %v2259
      %v2360 = vunpack.c.l.b16 %v2266
      %v2361 = vunpack.c.l.b16 %v2273
      %v2362 = vunpack.c.l.b16 %v2280
      %v2363 = vunpack.c.l.b16 %v2287
      %v2364 = vunpack.c.l.b16 %v2294
      %v2365 = vunpack.c.l.b16 %v2301
      %v2366 = vunpack.c.l.b16 %v2308
      %v2367 = vunpack.c.l.b16 %v2315
      %v2368 = vunpack.c.l.b16 %v2322
      %v2369 = vunpack.c.l.b16 %v2329
      %v2370 = vunpack.c.l.b16 %v2336
      %v2371 = vunpack.c.l.b16 %v2343
      %v2372 = vunpack.c.l.b16 %v2350
      %v2373 = vunpack.c.l.b16 %v2357
      %v2374 = vrot.slane %v2358, 2
      %v2375 = vrot.slane %v2359, 1
      %v2376 = vsel %vm608, %v2375, %v2374
      %v2377 = vsel %vm611, %v2360, %v2376
      %v2378 = vrot.slane %v2361, 7
      %v2379 = vsel %vm614, %v2378, %v2377
      %v2380 = vrot.slane %v2362, 6
      %v2381 = vsel %vm617, %v2380, %v2379
      %v2382 = vrot.slane %v2363, 5
      %v2383 = vsel %vm620, %v2382, %v2381
      %v2384 = vrot.slane %v2364, 4
      %v2385 = vsel %vm623, %v2384, %v2383
      %v2386 = vrot.slane %v2365, 3
      %v2387 = vsel %vm626, %v2386, %v2385
      %v2388 = vrot.slane %v2366, 2
      %v2389 = vrot.slane %v2367, 1
      %v2390 = vsel %vm608, %v2389, %v2388
      %v2391 = vsel %vm611, %v2368, %v2390
      %v2392 = vrot.slane %v2369, 7
      %v2393 = vsel %vm614, %v2392, %v2391
      %v2394 = vrot.slane %v2370, 6
      %v2395 = vsel %vm617, %v2394, %v2393
      %v2396 = vrot.slane %v2371, 5
      %v2397 = vsel %vm620, %v2396, %v2395
      %v2398 = vrot.slane %v2372, 4
      %v2399 = vsel %vm623, %v2398, %v2397
      %v2400 = vrot.slane %v2373, 3
      %v2401 = vsel %vm626, %v2400, %v2399
      %v2402 = vpack.c.b16 %v2401, %v2387
      %v2404 = vsel %vm643, %v2402, 0
      %v2407 = vand.u32 %v2229, %v649
      %2409 = vmatprep.subr.bf16.mxu0 0
      %2410 = vmatpush1.bf16.msra.mxu0 %v2407
      %2411 = vmatprep.subr.bf16.mxu0 0
      %2412 = vmatpush1.bf16.msra.mxu0 0
      %2413 = vmatprep.subr.bf16.mxu0 0
      %2414 = vmatpush1.bf16.msra.mxu0 0
      %2415 = vmatprep.subr.bf16.mxu0 0
      %2416 = vmatpush1.bf16.msra.mxu0 0
      %2417 = vmatprep.subr.bf16.mxu0 0
      %2418 = vmatpush1.bf16.msra.mxu0 0
      %2419 = vmatprep.subr.bf16.mxu0 0
      %2420 = vmatpush1.bf16.msra.mxu0 0
      %2421 = vmatprep.subr.bf16.mxu0 0
      %2422 = vmatpush1.bf16.msra.mxu0 0
      %2423 = vmatprep.subr.bf16.mxu0 0
      %2424 = vmatpush1.bf16.msra.mxu0 0
      %2425 = vmatprep.subr.bf16.mxu0 0
      %2426 = vmatpush1.bf16.msra.mxu0 0
      %2427 = vmatprep.subr.bf16.mxu0 0
      %2428 = vmatpush1.bf16.msra.mxu0 0
      %2429 = vmatprep.subr.bf16.mxu0 0
      %2430 = vmatpush1.bf16.msra.mxu0 0
      %2431 = vmatprep.subr.bf16.mxu0 0
      %2432 = vmatpush1.bf16.msra.mxu0 0
      %2433 = vmatprep.subr.bf16.mxu0 0
      %2434 = vmatpush1.bf16.msra.mxu0 0
      %2435 = vmatprep.subr.bf16.mxu0 0
      %2436 = vmatpush1.bf16.msra.mxu0 0
      %2437 = vmatprep.subr.bf16.mxu0 0
      %2438 = vmatpush1.bf16.msra.mxu0 0
      %2439 = vmatprep.subr.bf16.mxu0 0
      %2440 = vmatpush1.bf16.msra.mxu0 0
      %2441 = vmatprep.mubr.bf16.mxu0 0
      %2442 = vmatmul.mubr.bf16.gmra.mrb[0].mxu0 %v2404
      %v2443 = vpop.f32.mrb[0].mxu0
      %v2444 = vadd.f32 0.0, %v2443
      %v2445 = vpop.f32.mrb[0].mxu0
      %v2446 = vpop.f32.mrb[0].mxu0
      %v2447 = vadd.f32 0.0, %v2446
      %v2448 = vpop.f32.mrb[0].mxu0
      %2449 = vdwg.mxu0
      %v2450 = vadd.f32 %v2210, %v2444
      %v2451 = vadd.f32 %v2211, %v2447
      %v2452 = vld [vmem:[#allocation3] sm:$0x1]
      %v2454 = vlaneseq
      %v2455 = vshrl.u32 %v2454, 7
      %v2456 = vsub.s32 0, %v2455
      %v2457 = vrot.slane %v2452, %v2456
      %v2459 = vadd.f32 %v2450, %v2457
      %v2460 = vadd.f32 %v2451, %v2457
      %v2461 = vadd.f32 %v2459, 0.0
      %v2462 = vadd.f32 %v2460, 0.0
      %v2463 = vsub.f32 %v2459, %v2461
      %v2464 = vsub.f32 %v2460, %v2462
      %v2465 = vmul.f32 %v2463, %v2463
      %v2466 = vmul.f32 %v2464, %v2464
      %v2467 = vadd.f32 %v2465, 0.0
      %v2468 = vadd.f32 %v2466, 0.0
      %v2469 = vadd.f32 %v2467, 1e-05
      %v2470 = vadd.f32 %v2468, 1e-05
      %v2471 = vrsqrt.pop %v2469
      %v2472 = vrsqrt.pop %v2470
      %v2473 = vmul.f32 %v2463, %v2471
      %v2474 = vmul.f32 %v2464, %v2472
      %v2475 = vld [vmem:[#allocation4] sm:$0x1]
      %v2477 = vlaneseq
      %v2478 = vshrl.u32 %v2477, 7
      %v2479 = vsub.s32 0, %v2478
      %v2480 = vrot.slane %v2475, %v2479
      %v2482 = vmul.f32 %v2473, %v2480
      %v2483 = vmul.f32 %v2474, %v2480
      %v2484 = vld [vmem:[#allocation5] sm:$0x1]
      %v2486 = vlaneseq
      %v2487 = vshrl.u32 %v2486, 7
      %v2488 = vsub.s32 0, %v2487
      %v2489 = vrot.slane %v2484, %v2488
      %v2491 = vadd.f32 %v2482, %v2489
      %v2492 = vadd.f32 %v2483, %v2489
      %2493 = vst.msk [vmem:[%s365] sm:$0xff] %vm643, %v2491
      %2494 = vst.msk [vmem:[%s365 + $0x8] sm:$0xff] %vm643, %v2492
      %s2495 = smul.u32 2, %s28
      %p2496 = scmp.lt.s32.totalorder %s27, 1
      %s2497 = scalar_select %p2496, %s27, 1
      %p2498 = scmp.lt.s32.totalorder %s2495, 1
      %s2499 = scalar_select %p2498, %s2495, 1
      %s2500 = smul.addr %s2497, 2
      %s2501 = sadd.s32 %s2499, %s2500
      %s2502 = smul.addr %s2501, 8
      %s2503 = scalar_lea.vmem %s6, %s2502
      // Predicated region
      $region45: #{tpu_custom_call.1} parent=43 // pred_check
        %p2504 = pneg %p199
      $region46: #{tpu_custom_call.1} parent=43 // pred_check_branch
        %2506 = sbr.rel (%p2504) target = $region48
      $region47: #{tpu_custom_call.1} parent=43 // pred_region
        %s2507 = smul.u32 2, %s28
      $region48: #{tpu_custom_call.1} parent=43 // pred_fallthru
        _
    $region44: #{tpu_custom_call.1} parent=5 // pred_fallthru
      _
    %p2508 = scmp.le.s32.totalorder 2, %s18
    // Predicated region
    $region49: #{tpu_custom_call.1} parent=5 // pred_check
      %p2509 = pneg %p2508
    $region50: #{tpu_custom_call.1} parent=5 // pred_check_branch
      %2511 = sbr.rel (%p2509) target = $region52
    $region51: #{tpu_custom_call.1} parent=5 // pred_region
      %s2512 = ssub.s32 %s18, 2
      // Predicated region
      $region53: #{tpu_custom_call.1} parent=51 // pred_check
        %p2513 = pneg %p205
      $region54: #{tpu_custom_call.1} parent=51 // pred_check_branch
        %2515 = sbr.rel (%p2513) target = $region56
      $region55: #{tpu_custom_call.1} parent=51 // pred_region
        %s2516 = smul.u32 2, %s30
        %p2517 = scmp.lt.s32.totalorder %s29, 1
        %s2518 = scalar_select %p2517, %s29, 1
        %p2519 = scmp.lt.s32.totalorder %s2516, 1
        %s2520 = scalar_select %p2519, %s2516, 1
        %s2521 = smul.addr %s2518, 2
        %s2522 = sadd.s32 %s2520, %s2521
        %s2523 = smul.addr %s2522, 8
        %s2524 = scalar_lea.vmem %s6, %s2523
      $region56: #{tpu_custom_call.1} parent=51 // pred_fallthru
        _
    $region52: #{tpu_custom_call.1} parent=5 // pred_fallthru
      _
  $region6: #{tpu_custom_call.1} parent=0 // loop_footer
    %s22 = sadd.s32 1, %s18
  $region7: #{tpu_custom_call.1} parent=0 // loop_footer_branch
    %17 = sbr.rel target = $region3
  $region8: #{tpu_custom_call.1} parent=0 // loop_exit
    _

</llo_original>
